<compile_context>
chip_gen: v7x
topology: tpu7x:2x2x1
jax: 0.10.0
libtpu: 0.0.40
codegen_flags: <defaults>
</compile_context>

<pallas_src>
import functools

import jax
import jax.numpy as jnp
from jax.experimental import pallas as pl
from jax.experimental.pallas import tpu as pltpu


def _ordloss_kernel(w_total, p_ref, t_ref, out_ref):
    """One (core, w-tile) grid step.

    p_ref:   (N, TW, C) ordinal probabilities block (original NWC layout).
    t_ref:   (N, TW, 1) SID target block (float or int; truncated to int32).
    out_ref: (N, TW, C) f32 per-core partial-sum block, resident across the
             w-tile ("arbitrary") grid axis.
    """
    pid = pl.program_id(0)          # parallel (TensorCore) axis
    wi = pl.program_id(1)           # reduction axis over W tiles

    @pl.when(wi == 0)
    def _init():
        out_ref[...] = jnp.zeros_like(out_ref)

    n, tw, c = p_ref.shape
    p = p_ref[...].astype(jnp.float32)              # supports bf16 inputs
    t = t_ref[...].astype(jnp.int32)                # torch IntTensor truncation

    # K[n, w, c] = c : ordinal index along the channel (lane) axis.
    k = jax.lax.broadcasted_iota(jnp.int32, (n, tw, c), 2)
    mask0 = k <= t                                  # (N,TW,1) broadcast over lanes

    # Single log per element (clip is monotone -> select-then-clip == clip-then-select).
    sel = jnp.where(mask0, p, 1.0 - p)
    logv = jnp.log(jnp.maximum(sel, jnp.float32(1e-8)))

    # Zero out the W tail of the last tile and any overshoot iterations of the
    # parallel split (their DMA block indices were clamped in the index_map).
    tile_raw = pid * pl.num_programs(1) + wi
    w_idx = tile_raw * tw + jax.lax.broadcasted_iota(jnp.int32, (n, tw, c), 1)
    valid = w_idx < w_total

    out_ref[...] += jnp.where(valid, logv, 0.0)


def ord_loss(orig_ord_labels, orig_target, *, tw=None, num_parallel=2):
    """DORN ordinal loss.

    orig_ord_labels: (N, W, C) ordinal probabilities (float32 or bfloat16).
    orig_target:     (N, W) SID-discretised ground truth (float or int).
    Returns the scalar loss (float32), matching ordLoss.forward.
    """
    p = orig_ord_labels                         # consumed in NWC layout, no transpose
    n, w, c = p.shape
    t = orig_target.reshape(n, w, 1)            # free reshape; int cast happens in-kernel

    # ---- tile sizing: generation-aware VMEM budget --------------------------
    try:
        vmem_cap = int(pltpu.get_tpu_info().vmem_capacity_bytes)
    except Exception:                           # interpret mode / API drift
        vmem_cap = 64 * 1024 * 1024             # conservative (v7x-sized) fallback
    budget = min(vmem_cap // 4, 24 * 1024 * 1024)

    c_pad = ((c + 127) // 128) * 128            # lane padding of the channel axis
    # per unit of tw: double-buffered p + resident/double-buffered out + target
    bytes_per_w = n * (16 * c_pad + 1024)
    if tw is None:
        tw = max(128, (budget // bytes_per_w) // 128 * 128)
    if tw >= w:
        tw = w                                  # single full-W block (any W allowed)
    else:
        assert tw % 128 == 0, "tw must be a multiple of 128 (or >= W)"

    num_tiles = pl.cdiv(w, tw)
    num_par = max(1, min(num_parallel, num_tiles))
    tiles_per_core = pl.cdiv(num_tiles, num_par)

    def in_idx(pi, wi):
        # Clamp so the DMA never walks past the last tile; overshoot iterations
        # contribute zero via the in-kernel w < W mask.
        return (0, jnp.minimum(pi * tiles_per_core + wi, num_tiles - 1), 0)

    out = pl.pallas_call(
        functools.partial(_ordloss_kernel, w),
        out_shape=jax.ShapeDtypeStruct((num_par * n, tw, c), jnp.float32),
        grid_spec=pltpu.PrefetchScalarGridSpec(
            num_scalar_prefetch=0,
            grid=(num_par, tiles_per_core),
            in_specs=[
                pl.BlockSpec((n, tw, c), in_idx),
                pl.BlockSpec((n, tw, 1), in_idx),
            ],
            out_specs=pl.BlockSpec((n, tw, c), lambda pi, wi: (pi, 0, 0)),
        ),
        compiler_params=pltpu.CompilerParams(
            dimension_semantics=("parallel", "arbitrary"),
            vmem_limit_bytes=int(budget + (8 << 20)),
        ),
    )(p, t)

    # Tiny final reduction + normalisation in plain JAX.
    return jnp.sum(out) / jnp.float32(-(n * w))


def ord_loss_ref(orig_ord_labels, orig_target):
    """Pure-JAX reference mirroring the PyTorch forward exactly."""
    p = jnp.transpose(orig_ord_labels.astype(jnp.float32), (0, 2, 1))  # (N, C, W)
    n, c, w = p.shape
    k = jnp.arange(c, dtype=jnp.int32)[None, :, None]
    t = orig_target.astype(jnp.int32)[:, None, :]
    mask0 = k <= t
    log_p = jnp.log(jnp.clip(p, 1e-8, 1e8))
    log_1mp = jnp.log(jnp.clip(1.0 - p, 1e-8, 1e8))
    total = jnp.sum(jnp.where(mask0, log_p, log_1mp))
    return total / (-(n * w))


if __name__ == "__main__":
    key = jax.random.PRNGKey(0)
    k1, k2 = jax.random.split(key)

    # (N, W, C) probabilities + (N, W) SID target, as the forward implies.
    N, W, C = 2, 1000, 8
    ord_labels = jax.nn.sigmoid(jax.random.normal(k1, (N, W, C), dtype=jnp.float32))
    target = jax.random.randint(k2, (N, W), 0, C).astype(jnp.float32)

    ref = jax.block_until_ready(ord_loss_ref(ord_labels, target))

    # 1) explicit small tile: multi-tile grid, 2-way parallel split, W tail mask.
    out1 = jax.block_until_ready(ord_loss(ord_labels, target, tw=256))
    assert jnp.allclose(out1, ref, rtol=1e-5, atol=1e-5), (out1, ref)

    # 2) auto tile size (single full-W block here).
    out2 = jax.block_until_ready(ord_loss(ord_labels, target))
    assert jnp.allclose(out2, ref, rtol=1e-5, atol=1e-5), (out2, ref)

    # 3) bf16 probabilities + odd tile count (exercises the clamped index_map).
    ord_bf16 = ord_labels.astype(jnp.bfloat16)
    ref_bf16 = jax.block_until_ready(ord_loss_ref(ord_bf16, target))
    out3 = jax.block_until_ready(ord_loss(ord_bf16, target, tw=384))
    assert jnp.allclose(out3, ref_bf16, rtol=1e-5, atol=1e-5), (out3, ref_bf16)

    print("KERNEL_OK")
</pallas_src>

<mosaic_0001>
module attributes {stable_mosaic.version = 11 : i64} {
  func.func @_ordloss_kernel(%arg0: i32, %arg1: i32, %arg2: memref<2x256x8xf32, #tpu.memory_space<vmem>>, %arg3: memref<2x256x1xf32, #tpu.memory_space<vmem>>, %arg4: memref<2x256x8xf32, #tpu.memory_space<vmem>>) attributes {dimension_semantics = [#tpu.dimension_semantics<parallel>, #tpu.dimension_semantics<arbitrary>], iteration_bounds = array<i64: 2, 2>, scalar_prefetch = 0 : i64, scratch_operands = 0 : i64, tpu.core_type = #tpu.core_type<tc>, window_params = [{transform_indices = @transform_0, window_bounds = array<i64: 2, 256, 8>}, {transform_indices = @transform_1, window_bounds = array<i64: 2, 256, 1>}, {transform_indices = @transform_2, window_bounds = array<i64: 2, 256, 8>}]} {
    %c0_i32 = arith.constant 0 : i32
    %0 = arith.cmpi eq, %arg1, %c0_i32 : i32
    %1 = arith.extui %0 : i1 to i32
    %c0_i32_0 = arith.constant 0 : i32
    %2 = arith.cmpi ne, %1, %c0_i32_0 : i32
    scf.if %2 {
      %cst_14 = arith.constant 0.000000e+00 : f32
      %28 = vector.broadcast %cst_14 : f32 to vector<2x256x8xf32>
      %c0_15 = arith.constant 0 : index
      %c0_16 = arith.constant 0 : index
      %c0_17 = arith.constant 0 : index
      %29 = vector.load %arg4[%c0_15, %c0_16, %c0_17] : memref<2x256x8xf32, #tpu.memory_space<vmem>>, vector<2x256x8xf32>
      tpu.vector_store %arg4[%c0_15, %c0_16, %c0_17], %28 {strides = array<i32>} : memref<2x256x8xf32, #tpu.memory_space<vmem>>, vector<2x256x8xf32>,
    } else {
    }
    %c0 = arith.constant 0 : index
    %c0_1 = arith.constant 0 : index
    %c0_2 = arith.constant 0 : index
    %3 = vector.load %arg2[%c0, %c0_1, %c0_2] : memref<2x256x8xf32, #tpu.memory_space<vmem>>, vector<2x256x8xf32>
    %c0_3 = arith.constant 0 : index
    %c0_4 = arith.constant 0 : index
    %c0_5 = arith.constant 0 : index
    %4 = vector.load %arg3[%c0_3, %c0_4, %c0_5] : memref<2x256x1xf32, #tpu.memory_space<vmem>>, vector<2x256x1xf32>
    %5 = arith.fptosi %4 : vector<2x256x1xf32> to vector<2x256x1xi32>
    %6 = tpu.iota {dimensions = array<i32: 2>} : vector<2x256x8xi32>
    %7 = vector.broadcast %5 : vector<2x256x1xi32> to vector<2x256x8xi32>
    %8 = arith.cmpi sle, %6, %7 : vector<2x256x8xi32>
    %cst = arith.constant 1.000000e+00 : f32
    %9 = vector.broadcast %cst : f32 to vector<2x256x8xf32>
    %10 = arith.subf %9, %3 : vector<2x256x8xf32>
    %11 = arith.select %8, %3, %10 : vector<2x256x8xi1>, vector<2x256x8xf32>
    %cst_6 = arith.constant 9.99999993E-9 : f32
    %12 = vector.broadcast %cst_6 : f32 to vector<2x256x8xf32>
    %13 = arith.maximumf %11, %12 : vector<2x256x8xf32>
    %14 = math.log %13 : vector<2x256x8xf32>
    %c2_i32 = arith.constant 2 : i32
    %15 = arith.muli %arg0, %c2_i32 : i32
    %16 = arith.addi %15, %arg1 : i32
    %c256_i32 = arith.constant 256 : i32
    %17 = arith.muli %16, %c256_i32 : i32
    %18 = tpu.iota {dimensions = array<i32: 1>} : vector<2x256x8xi32>
    %19 = vector.broadcast %17 : i32 to vector<2x256x8xi32>
    %20 = arith.addi %19, %18 : vector<2x256x8xi32>
    %c1000_i32 = arith.constant 1000 : i32
    %21 = vector.broadcast %c1000_i32 : i32 to vector<2x256x8xi32>
    %22 = arith.cmpi slt, %20, %21 : vector<2x256x8xi32>
    %c0_7 = arith.constant 0 : index
    %c0_8 = arith.constant 0 : index
    %c0_9 = arith.constant 0 : index
    %23 = vector.load %arg4[%c0_7, %c0_8, %c0_9] : memref<2x256x8xf32, #tpu.memory_space<vmem>>, vector<2x256x8xf32>
    %cst_10 = arith.constant 0.000000e+00 : f32
    %24 = vector.broadcast %cst_10 : f32 to vector<2x256x8xf32>
    %25 = arith.select %22, %14, %24 : vector<2x256x8xi1>, vector<2x256x8xf32>
    %26 = arith.addf %23, %25 : vector<2x256x8xf32>
    %c0_11 = arith.constant 0 : index
    %c0_12 = arith.constant 0 : index
    %c0_13 = arith.constant 0 : index
    %27 = vector.load %arg4[%c0_11, %c0_12, %c0_13] : memref<2x256x8xf32, #tpu.memory_space<vmem>>, vector<2x256x8xf32>
    tpu.vector_store %arg4[%c0_11, %c0_12, %c0_13], %26 {strides = array<i32>} : memref<2x256x8xf32, #tpu.memory_space<vmem>>, vector<2x256x8xf32>,
    return
  }
  func.func @transform_0(%arg0: i32, %arg1: i32) -> (i32, i32, i32) {
    %c2_i32 = arith.constant 2 : i32
    %0 = arith.muli %arg0, %c2_i32 : i32
    %1 = arith.addi %0, %arg1 : i32
    %c3_i32 = arith.constant 3 : i32
    %2 = arith.minsi %1, %c3_i32 : i32
    %c0_i32 = arith.constant 0 : i32
    %c0_i32_0 = arith.constant 0 : i32
    %c0_i32_1 = arith.constant 0 : i32
    return %c0_i32, %2, %c0_i32_0 : i32, i32, i32
  }
  func.func @transform_1(%arg0: i32, %arg1: i32) -> (i32, i32, i32) {
    %c2_i32 = arith.constant 2 : i32
    %0 = arith.muli %arg0, %c2_i32 : i32
    %1 = arith.addi %0, %arg1 : i32
    %c3_i32 = arith.constant 3 : i32
    %2 = arith.minsi %1, %c3_i32 : i32
    %c0_i32 = arith.constant 0 : i32
    %c0_i32_0 = arith.constant 0 : i32
    %c0_i32_1 = arith.constant 0 : i32
    return %c0_i32, %2, %c0_i32_0 : i32, i32, i32
  }
  func.func @transform_2(%arg0: i32, %arg1: i32) -> (i32, i32, i32) {
    %c0_i32 = arith.constant 0 : i32
    %c0_i32_0 = arith.constant 0 : i32
    %c0_i32_1 = arith.constant 0 : i32
    return %arg0, %c0_i32, %c0_i32_0 : i32, i32, i32
  }
}

</mosaic_0001>

<llo_original>
// kernel: tpu_custom_call.1
$region0: #{tpu_custom_call.1}
  #allocation0 [shape = 'u32[]', space=smem, size = 0x4, offset = 0x4, fixed_abs, tag = 'smem constant byte address 0x4 - core index']
  #allocation1 [shape = 'u32[144,128]{1,0:T(1,128)}', space=vmem, size = 0x12000, scoped, tag = 'internal scratch']
  %s0 = inlined_call_operand.vmem [shape: f32[2,1000,8], index: 0, kind: input, shape index: {}]
  %s1 = inlined_call_operand.vmem [shape: f32[2,1000,1], index: 1, kind: input, shape index: {}]
  %s2 = inlined_call_operand.vmem [shape: f32[4,256,8], index: 2, kind: output, shape index: {}]
  %s3 = sld [smem:[#allocation0]]
  $region149: #{tpu_custom_call.1} parent=0
    _
  %s5 = ssub.s32 1, %s3
  %s6 = scalar_select 0, %s5, %s3
  $region1: #{tpu_custom_call.1} parent=0
    #allocation2 [shape = 'u8[524288]{0}', space=vmem, size = 0x80000, scoped, tag = 'input window, operand 0']
    #allocation3 [shape = 'u8[524288]{0}', space=vmem, size = 0x80000, scoped, tag = 'input window, operand 1']
    loop: start=0, step=1, limit=6
    $region2: #{tpu_custom_call.1} parent=1 // loop_pre_header
      _
    $region3: #{tpu_custom_call.1} parent=1 // loop_header
      %s8 = sphi 0, %s12
      %p9 = scmp.ge.s32.totalorder %s8, 6
      %s15 = sphi 0, %s27
      %s16 = sphi 0, %s23
      %s17 = sphi 0, %s15
      %s18 = sphi 0, %s16
      %s19 = sphi 0, %s17
      %s20 = sphi 0, %s18
      %s38 = sphi 0, %s40
      %s41 = sphi 0, %s38
      %s42 = sphi 0, %s41
      %s58 = sphi 0, %s42
      %s72 = sphi 0, %s74
      %s75 = sphi 0, %s72
      %s76 = sphi 0, %s75
      %s92 = sphi 0, %s76
      %s98 = sphi 0, %s100
      %s101 = sphi 0, %s98
      %s102 = sphi 0, %s101
      %s118 = sphi 0, %s102
    $region4: #{tpu_custom_call.1} parent=1 // loop_header_branch
      %11 = sbr.rel (%p9) target = $region8
    $region5: #{tpu_custom_call.1} parent=1 // loop_body
      %s13 = ssub.s32 %s8, 1
      %s14 = ssub.s32 %s8, 2
      %s21 = sadd.s32 1, %s16
      %p22 = scmp.ge.s32.totalorder %s21, 2
      %s23 = scalar_select %p22, 0, %s21
      %s24 = sadd.s32 1, %s15
      %s25 = scalar_select %p22, %s24, %s15
      %p26 = scmp.ge.s32.totalorder %s25, 2
      %s27 = scalar_select %p26, 0, %s25
      %s28 = smul.u32 %s15, 2
      %s29 = sadd.s32 %s28, %s16
      %p30 = scmp.lt.s32.totalorder %s29, 3
      %s31 = scalar_select %p30, %s29, 3
      %s32 = smul.u32 %s27, 2
      %s33 = sadd.s32 %s32, %s23
      %p34 = scmp.lt.s32.totalorder %s33, 3
      %s35 = scalar_select %p34, %s33, 3
      %s36 = ssub.s32 %s31, %s35
      %p37 = scmp.eq.s32.totalorder %s36, 0
      %s39 = sadd.s32 %s38, 1
      %s40 = scalar_select %p37, %s38, %s39
      %p43 = pneg %p37
      %p44 = scmp.eq.s32.totalorder %s8, 3
      %p45 = por %p43, %p44
      %p46 = scmp.ne.s32.totalorder %s38, %s41
      %p47 = scmp.eq.s32.totalorder %s8, 0
      %p48 = por %p46, %p47
      %p49 = scmp.ne.s32.totalorder %s38, %s41
      %p50 = scmp.eq.s32.totalorder %s13, 3
      %p51 = por %p49, %p50
      %p52 = scmp.ne.s32.totalorder %s41, %s42
      %p53 = scmp.eq.s32.totalorder %s13, 0
      %p54 = por %p52, %p53
      %p55 = scmp.ne.s32.totalorder %s41, %s42
      %p56 = scmp.eq.s32.totalorder %s14, 3
      %p57 = por %p55, %p56
      %p59 = scmp.ne.s32.totalorder %s42, %s58
      %p60 = scmp.eq.s32.totalorder %s14, 0
      %p61 = por %p59, %p60
      %s62 = smul.u32 %s15, 2
      %s63 = sadd.s32 %s62, %s16
      %p64 = scmp.lt.s32.totalorder %s63, 3
      %s65 = scalar_select %p64, %s63, 3
      %s66 = smul.u32 %s27, 2
      %s67 = sadd.s32 %s66, %s23
      %p68 = scmp.lt.s32.totalorder %s67, 3
      %s69 = scalar_select %p68, %s67, 3
      %s70 = ssub.s32 %s65, %s69
      %p71 = scmp.eq.s32.totalorder %s70, 0
      %s73 = sadd.s32 %s72, 1
      %s74 = scalar_select %p71, %s72, %s73
      %p77 = pneg %p71
      %p78 = scmp.eq.s32.totalorder %s8, 3
      %p79 = por %p77, %p78
      %p80 = scmp.ne.s32.totalorder %s72, %s75
      %p81 = scmp.eq.s32.totalorder %s8, 0
      %p82 = por %p80, %p81
      %p83 = scmp.ne.s32.totalorder %s72, %s75
      %p84 = scmp.eq.s32.totalorder %s13, 3
      %p85 = por %p83, %p84
      %p86 = scmp.ne.s32.totalorder %s75, %s76
      %p87 = scmp.eq.s32.totalorder %s13, 0
      %p88 = por %p86, %p87
      %p89 = scmp.ne.s32.totalorder %s75, %s76
      %p90 = scmp.eq.s32.totalorder %s14, 3
      %p91 = por %p89, %p90
      %p93 = scmp.ne.s32.totalorder %s76, %s92
      %p94 = scmp.eq.s32.totalorder %s14, 0
      %p95 = por %p93, %p94
      %s96 = ssub.s32 %s15, %s27
      %p97 = scmp.eq.s32.totalorder %s96, 0
      %s99 = sadd.s32 %s98, 1
      %s100 = scalar_select %p97, %s98, %s99
      %p103 = pneg %p97
      %p104 = scmp.eq.s32.totalorder %s8, 3
      %p105 = por %p103, %p104
      %p106 = scmp.ne.s32.totalorder %s98, %s101
      %p107 = scmp.eq.s32.totalorder %s8, 0
      %p108 = por %p106, %p107
      %p109 = scmp.ne.s32.totalorder %s98, %s101
      %p110 = scmp.eq.s32.totalorder %s13, 3
      %p111 = por %p109, %p110
      %p112 = scmp.ne.s32.totalorder %s101, %s102
      %p113 = scmp.eq.s32.totalorder %s13, 0
      %p114 = por %p112, %p113
      %p115 = scmp.ne.s32.totalorder %s101, %s102
      %p116 = scmp.eq.s32.totalorder %s14, 3
      %p117 = por %p115, %p116
      %p119 = scmp.ne.s32.totalorder %s102, %s118
      %p120 = scmp.eq.s32.totalorder %s14, 0
      %p121 = por %p119, %p120
      %p122 = scmp.le.s32.totalorder 1, %s8
      %p123 = scmp.lt.s32.totalorder %s8, 5
      %p124 = pnand %p122, %p123
      %p125 = pneg %p124
      // Predicated region
      $region9: #{tpu_custom_call.1} parent=5 // pred_check
        _
      $region10: #{tpu_custom_call.1} parent=5 // pred_check_branch
        %127 = sbr.rel (%p124) target = $region12
      $region11: #{tpu_custom_call.1} parent=5 // pred_region
        %s128 = ssub.s32 %s8, 1
      $region12: #{tpu_custom_call.1} parent=5 // pred_fallthru
        _
      %p129 = scmp.lt.s32.totalorder %s8, 4
      // Predicated region
      $region13: #{tpu_custom_call.1} parent=5 // pred_check
        %p130 = pneg %p129
      $region14: #{tpu_custom_call.1} parent=5 // pred_check_branch
        %132 = sbr.rel (%p130) target = $region16
      $region15: #{tpu_custom_call.1} parent=5 // pred_region
        // Predicated region
        $region17: #{tpu_custom_call.1} parent=15 // pred_check
          %p133 = pneg %p48
        $region18: #{tpu_custom_call.1} parent=15 // pred_check_branch
          %135 = sbr.rel (%p133) target = $region20
        $region19: #{tpu_custom_call.1} parent=15 // pred_region
          %s136 = sand.u32 %s38, 1
          %s137 = sand.u32 %s38, 1
          %s138 = smul.addr %s137, 512
          %s139 = scalar_lea.vmem [#allocation2], %s138
          %s140 = smul.u32 %s15, 2
          %s141 = sadd.s32 %s140, %s16
          %p142 = scmp.lt.s32.totalorder %s141, 3
          %s143 = scalar_select %p142, %s141, 3
          %s144 = smul.u32 32, %s143
          %s145 = ssub.s32 125, %s144
          %p146 = scmp.lt.s32.totalorder %s145, 32
          %s147 = scalar_select %p146, %s145, 32
          %s148 = smul.u32 256, %s147
          %p149 = scmp.ne.s32.totalorder 0, %s148
          %s150 = smul.addr %s144, 8
          %s151 = scalar_lea.vmem %s0, %s150
          // Predicated region
          $region21: #{tpu_custom_call.1} parent=19 // pred_check
            %p152 = pneg %p149
          $region22: #{tpu_custom_call.1} parent=19 // pred_check_branch
            %154 = sbr.rel (%p152) target = $region24
          $region23: #{tpu_custom_call.1} parent=19 // pred_region
            // Predicated region
            $region25: #{tpu_custom_call.1} parent=23 // pred_check
              _
            $region26: #{tpu_custom_call.1} parent=23 // pred_check_branch
              %156 = sbr.rel (0) target = $region28
            $region27: #{tpu_custom_call.1} parent=23 // pred_region
              // Predicated region
              $region47: #{tpu_custom_call.1} parent=27 // pred_check
                _
              $region48: #{tpu_custom_call.1} parent=27 // pred_check_branch
                %333 = sbr.rel (0) target = $region50
              $region49: #{tpu_custom_call.1} parent=27 // pred_region
                %s334 = sshrl.u32 %s147, 5
                // While loop
                $region51: #{tpu_custom_call.1} parent=49 // loop_pre_header
                  _
                $region52: #{tpu_custom_call.1} parent=49 // loop_header
                  %s336 = sphi 0, %s338
                  %p337 = scmp.ge.s32.totalorder %s336, %s334
                  %s341 = sphi 0, %s474
                  %s342 = sphi %s151, %s477
                  %s343 = sphi %s139, %s478
                $region53: #{tpu_custom_call.1} parent=49 // loop_header_branch
                  %340 = sbr.rel (%p337) target = $region57
                $region54: #{tpu_custom_call.1} parent=49 // loop_body
                  %v344 = vld [vmem:[%s342] sm:$0xff]
                  %345 = vst [vmem:[%s343] sm:$0xff] %v344
                  %v346 = vld [vmem:[%s342 + $0x8] sm:$0xff]
                  %347 = vst [vmem:[%s343 + $0x8] sm:$0xff] %v346
                  %v348 = vld [vmem:[%s342 + $0x10] sm:$0xff]
                  %349 = vst [vmem:[%s343 + $0x10] sm:$0xff] %v348
                  %v350 = vld [vmem:[%s342 + $0x18] sm:$0xff]
                  %351 = vst [vmem:[%s343 + $0x18] sm:$0xff] %v350
                  %v352 = vld [vmem:[%s342 + $0x20] sm:$0xff]
                  %353 = vst [vmem:[%s343 + $0x20] sm:$0xff] %v352
                  %v354 = vld [vmem:[%s342 + $0x28] sm:$0xff]
                  %355 = vst [vmem:[%s343 + $0x28] sm:$0xff] %v354
                  %v356 = vld [vmem:[%s342 + $0x30] sm:$0xff]
                  %357 = vst [vmem:[%s343 + $0x30] sm:$0xff] %v356
                  %v358 = vld [vmem:[%s342 + $0x38] sm:$0xff]
                  %359 = vst [vmem:[%s343 + $0x38] sm:$0xff] %v358
                  %v360 = vld [vmem:[%s342 + $0x40] sm:$0xff]
                  %361 = vst [vmem:[%s343 + $0x40] sm:$0xff] %v360
                  %v362 = vld [vmem:[%s342 + $0x48] sm:$0xff]
                  %363 = vst [vmem:[%s343 + $0x48] sm:$0xff] %v362
                  %v364 = vld [vmem:[%s342 + $0x50] sm:$0xff]
                  %365 = vst [vmem:[%s343 + $0x50] sm:$0xff] %v364
                  %v366 = vld [vmem:[%s342 + $0x58] sm:$0xff]
                  %367 = vst [vmem:[%s343 + $0x58] sm:$0xff] %v366
                  %v368 = vld [vmem:[%s342 + $0x60] sm:$0xff]
                  %369 = vst [vmem:[%s343 + $0x60] sm:$0xff] %v368
                  %v370 = vld [vmem:[%s342 + $0x68] sm:$0xff]
                  %371 = vst [vmem:[%s343 + $0x68] sm:$0xff] %v370
                  %v372 = vld [vmem:[%s342 + $0x70] sm:$0xff]
                  %373 = vst [vmem:[%s343 + $0x70] sm:$0xff] %v372
                  %v374 = vld [vmem:[%s342 + $0x78] sm:$0xff]
                  %375 = vst [vmem:[%s343 + $0x78] sm:$0xff] %v374
                  %v376 = vld [vmem:[%s342 + $0x80] sm:$0xff]
                  %377 = vst [vmem:[%s343 + $0x80] sm:$0xff] %v376
                  %v378 = vld [vmem:[%s342 + $0x88] sm:$0xff]
                  %379 = vst [vmem:[%s343 + $0x88] sm:$0xff] %v378
                  %v380 = vld [vmem:[%s342 + $0x90] sm:$0xff]
                  %381 = vst [vmem:[%s343 + $0x90] sm:$0xff] %v380
                  %v382 = vld [vmem:[%s342 + $0x98] sm:$0xff]
                  %383 = vst [vmem:[%s343 + $0x98] sm:$0xff] %v382
                  %v384 = vld [vmem:[%s342 + $0xa0] sm:$0xff]
                  %385 = vst [vmem:[%s343 + $0xa0] sm:$0xff] %v384
                  %v386 = vld [vmem:[%s342 + $0xa8] sm:$0xff]
                  %387 = vst [vmem:[%s343 + $0xa8] sm:$0xff] %v386
                  %v388 = vld [vmem:[%s342 + $0xb0] sm:$0xff]
                  %389 = vst [vmem:[%s343 + $0xb0] sm:$0xff] %v388
                  %v390 = vld [vmem:[%s342 + $0xb8] sm:$0xff]
                  %391 = vst [vmem:[%s343 + $0xb8] sm:$0xff] %v390
                  %v392 = vld [vmem:[%s342 + $0xc0] sm:$0xff]
                  %393 = vst [vmem:[%s343 + $0xc0] sm:$0xff] %v392
                  %v394 = vld [vmem:[%s342 + $0xc8] sm:$0xff]
                  %395 = vst [vmem:[%s343 + $0xc8] sm:$0xff] %v394
                  %v396 = vld [vmem:[%s342 + $0xd0] sm:$0xff]
                  %397 = vst [vmem:[%s343 + $0xd0] sm:$0xff] %v396
                  %v398 = vld [vmem:[%s342 + $0xd8] sm:$0xff]
                  %399 = vst [vmem:[%s343 + $0xd8] sm:$0xff] %v398
                  %v400 = vld [vmem:[%s342 + $0xe0] sm:$0xff]
                  %401 = vst [vmem:[%s343 + $0xe0] sm:$0xff] %v400
                  %v402 = vld [vmem:[%s342 + $0xe8] sm:$0xff]
                  %403 = vst [vmem:[%s343 + $0xe8] sm:$0xff] %v402
                  %v404 = vld [vmem:[%s342 + $0xf0] sm:$0xff]
                  %405 = vst [vmem:[%s343 + $0xf0] sm:$0xff] %v404
                  %v406 = vld [vmem:[%s342 + $0xf8] sm:$0xff]
                  %407 = vst [vmem:[%s343 + $0xf8] sm:$0xff] %v406
                  %v408 = vld [vmem:[%s342 + $0x3e8] sm:$0xff]
                  %409 = vst [vmem:[%s343 + $0x100] sm:$0xff] %v408
                  %v410 = vld [vmem:[%s342 + $0x3f0] sm:$0xff]
                  %411 = vst [vmem:[%s343 + $0x108] sm:$0xff] %v410
                  %v412 = vld [vmem:[%s342 + $0x3f8] sm:$0xff]
                  %413 = vst [vmem:[%s343 + $0x110] sm:$0xff] %v412
                  %v414 = vld [vmem:[%s342 + $0x400] sm:$0xff]
                  %415 = vst [vmem:[%s343 + $0x118] sm:$0xff] %v414
                  %v416 = vld [vmem:[%s342 + $0x408] sm:$0xff]
                  %417 = vst [vmem:[%s343 + $0x120] sm:$0xff] %v416
                  %v418 = vld [vmem:[%s342 + $0x410] sm:$0xff]
                  %419 = vst [vmem:[%s343 + $0x128] sm:$0xff] %v418
                  %v420 = vld [vmem:[%s342 + $0x418] sm:$0xff]
                  %421 = vst [vmem:[%s343 + $0x130] sm:$0xff] %v420
                  %v422 = vld [vmem:[%s342 + $0x420] sm:$0xff]
                  %423 = vst [vmem:[%s343 + $0x138] sm:$0xff] %v422
                  %v424 = vld [vmem:[%s342 + $0x428] sm:$0xff]
                  %425 = vst [vmem:[%s343 + $0x140] sm:$0xff] %v424
                  %v426 = vld [vmem:[%s342 + $0x430] sm:$0xff]
                  %427 = vst [vmem:[%s343 + $0x148] sm:$0xff] %v426
                  %v428 = vld [vmem:[%s342 + $0x438] sm:$0xff]
                  %429 = vst [vmem:[%s343 + $0x150] sm:$0xff] %v428
                  %v430 = vld [vmem:[%s342 + $0x440] sm:$0xff]
                  %431 = vst [vmem:[%s343 + $0x158] sm:$0xff] %v430
                  %v432 = vld [vmem:[%s342 + $0x448] sm:$0xff]
                  %433 = vst [vmem:[%s343 + $0x160] sm:$0xff] %v432
                  %v434 = vld [vmem:[%s342 + $0x450] sm:$0xff]
                  %435 = vst [vmem:[%s343 + $0x168] sm:$0xff] %v434
                  %v436 = vld [vmem:[%s342 + $0x458] sm:$0xff]
                  %437 = vst [vmem:[%s343 + $0x170] sm:$0xff] %v436
                  %v438 = vld [vmem:[%s342 + $0x460] sm:$0xff]
                  %439 = vst [vmem:[%s343 + $0x178] sm:$0xff] %v438
                  %v440 = vld [vmem:[%s342 + $0x468] sm:$0xff]
                  %441 = vst [vmem:[%s343 + $0x180] sm:$0xff] %v440
                  %v442 = vld [vmem:[%s342 + $0x470] sm:$0xff]
                  %443 = vst [vmem:[%s343 + $0x188] sm:$0xff] %v442
                  %v444 = vld [vmem:[%s342 + $0x478] sm:$0xff]
                  %445 = vst [vmem:[%s343 + $0x190] sm:$0xff] %v444
                  %v446 = vld [vmem:[%s342 + $0x480] sm:$0xff]
                  %447 = vst [vmem:[%s343 + $0x198] sm:$0xff] %v446
                  %v448 = vld [vmem:[%s342 + $0x488] sm:$0xff]
                  %449 = vst [vmem:[%s343 + $0x1a0] sm:$0xff] %v448
                  %v450 = vld [vmem:[%s342 + $0x490] sm:$0xff]
                  %451 = vst [vmem:[%s343 + $0x1a8] sm:$0xff] %v450
                  %v452 = vld [vmem:[%s342 + $0x498] sm:$0xff]
                  %453 = vst [vmem:[%s343 + $0x1b0] sm:$0xff] %v452
                  %v454 = vld [vmem:[%s342 + $0x4a0] sm:$0xff]
                  %455 = vst [vmem:[%s343 + $0x1b8] sm:$0xff] %v454
                  %v456 = vld [vmem:[%s342 + $0x4a8] sm:$0xff]
                  %457 = vst [vmem:[%s343 + $0x1c0] sm:$0xff] %v456
                  %v458 = vld [vmem:[%s342 + $0x4b0] sm:$0xff]
                  %459 = vst [vmem:[%s343 + $0x1c8] sm:$0xff] %v458
                  %v460 = vld [vmem:[%s342 + $0x4b8] sm:$0xff]
                  %461 = vst [vmem:[%s343 + $0x1d0] sm:$0xff] %v460
                  %v462 = vld [vmem:[%s342 + $0x4c0] sm:$0xff]
                  %463 = vst [vmem:[%s343 + $0x1d8] sm:$0xff] %v462
                  %v464 = vld [vmem:[%s342 + $0x4c8] sm:$0xff]
                  %465 = vst [vmem:[%s343 + $0x1e0] sm:$0xff] %v464
                  %v466 = vld [vmem:[%s342 + $0x4d0] sm:$0xff]
                  %467 = vst [vmem:[%s343 + $0x1e8] sm:$0xff] %v466
                  %v468 = vld [vmem:[%s342 + $0x4d8] sm:$0xff]
                  %469 = vst [vmem:[%s343 + $0x1f0] sm:$0xff] %v468
                  %v470 = vld [vmem:[%s342 + $0x4e0] sm:$0xff]
                  %471 = vst [vmem:[%s343 + $0x1f8] sm:$0xff] %v470
                  %s472 = sadd.s32 1, %s341
                  %p473 = scmp.ge.s32.totalorder %s472, %s334
                  %s474 = scalar_select %p473, 0, %s472
                  %s475 = smul.u32 %s474, 256
                  %s476 = smul.u32 %s474, 256
                  %s477 = scalar_lea.vmem %s151, %s475
                  %s478 = scalar_lea.vmem %s139, %s476 [#allocation2]
                $region55: #{tpu_custom_call.1} parent=49 // loop_footer
                  %s338 = sadd.s32 %s336, 1
                $region56: #{tpu_custom_call.1} parent=49 // loop_footer_branch
                  %335 = sbr.rel target = $region52
                $region57: #{tpu_custom_call.1} parent=49 // loop_exit
                  _
                %s479 = sshrl.u32 %s147, 5
                %s480 = sand.u32 %s147, 31
                %s481 = smul.u32 %s479, 32
                %s482 = smul.u32 8, %s481
                %s483 = scalar_lea.vmem %s151, %s482
                %s484 = smul.u32 8, %s481
                %s485 = scalar_lea.vmem %s139, %s484 [#allocation2]
                // While loop
                $region58: #{tpu_custom_call.1} parent=49 // loop_pre_header
                  _
                $region59: #{tpu_custom_call.1} parent=49 // loop_header
                  %s487 = sphi 0, %s489
                  %p488 = scmp.ge.s32.totalorder %s487, %s480
                  %s492 = sphi 0, %s501
                  %s493 = sphi %s483, %s504
                  %s494 = sphi %s485, %s505
                $region60: #{tpu_custom_call.1} parent=49 // loop_header_branch
                  %491 = sbr.rel (%p488) target = $region64
                $region61: #{tpu_custom_call.1} parent=49 // loop_body
                  %v495 = vld [vmem:[%s493] sm:$0xff]
                  %496 = vst [vmem:[%s494] sm:$0xff] %v495
                  %v497 = vld [vmem:[%s493 + $0x3e8] sm:$0xff]
                  %498 = vst [vmem:[%s494 + $0x100] sm:$0xff] %v497
                  %s499 = sadd.s32 1, %s492
                  %p500 = scmp.ge.s32.totalorder %s499, %s480
                  %s501 = scalar_select %p500, 0, %s499
                  %s502 = smul.u32 %s501, 8
                  %s503 = smul.u32 %s501, 8
                  %s504 = scalar_lea.vmem %s483, %s502
                  %s505 = scalar_lea.vmem %s485, %s503 [#allocation2]
                $region62: #{tpu_custom_call.1} parent=49 // loop_footer
                  %s489 = sadd.s32 %s487, 1
                $region63: #{tpu_custom_call.1} parent=49 // loop_footer_branch
                  %486 = sbr.rel target = $region59
                $region64: #{tpu_custom_call.1} parent=49 // loop_exit
                  _
              $region50: #{tpu_custom_call.1} parent=27 // pred_fallthru
                _
              // Predicated region
              $region65: #{tpu_custom_call.1} parent=27 // pred_check
                _
              $region66: #{tpu_custom_call.1} parent=27 // pred_check_branch
                %507 = sbr.rel target = $region68
              $region67: #{tpu_custom_call.1} parent=27 // pred_region
                _
              $region68: #{tpu_custom_call.1} parent=27 // pred_fallthru
                _
            $region28: #{tpu_custom_call.1} parent=23 // pred_fallthru
              _
            // Predicated region
            $region29: #{tpu_custom_call.1} parent=23 // pred_check
              _
            $region30: #{tpu_custom_call.1} parent=23 // pred_check_branch
              %158 = sbr.rel target = $region32
            $region31: #{tpu_custom_call.1} parent=23 // pred_region
              %s160 = sshrl.u32 %s147, 5
              // While loop
              $region33: #{tpu_custom_call.1} parent=31 // loop_pre_header
                _
              $region34: #{tpu_custom_call.1} parent=31 // loop_header
                %s162 = sphi 0, %s164
                %p163 = scmp.ge.s32.totalorder %s162, %s160
                %s167 = sphi 0, %s300
                %s168 = sphi %s151, %s303
                %s169 = sphi %s139, %s304
              $region35: #{tpu_custom_call.1} parent=31 // loop_header_branch
                %166 = sbr.rel (%p163) target = $region39
              $region36: #{tpu_custom_call.1} parent=31 // loop_body
                %v170 = vld [vmem:[%s168] sm:$0xff]
                %171 = vst [vmem:[%s169] sm:$0xff] %v170
                %v172 = vld [vmem:[%s168 + $0x8] sm:$0xff]
                %173 = vst [vmem:[%s169 + $0x8] sm:$0xff] %v172
                %v174 = vld [vmem:[%s168 + $0x10] sm:$0xff]
                %175 = vst [vmem:[%s169 + $0x10] sm:$0xff] %v174
                %v176 = vld [vmem:[%s168 + $0x18] sm:$0xff]
                %177 = vst [vmem:[%s169 + $0x18] sm:$0xff] %v176
                %v178 = vld [vmem:[%s168 + $0x20] sm:$0xff]
                %179 = vst [vmem:[%s169 + $0x20] sm:$0xff] %v178
                %v180 = vld [vmem:[%s168 + $0x28] sm:$0xff]
                %181 = vst [vmem:[%s169 + $0x28] sm:$0xff] %v180
                %v182 = vld [vmem:[%s168 + $0x30] sm:$0xff]
                %183 = vst [vmem:[%s169 + $0x30] sm:$0xff] %v182
                %v184 = vld [vmem:[%s168 + $0x38] sm:$0xff]
                %185 = vst [vmem:[%s169 + $0x38] sm:$0xff] %v184
                %v186 = vld [vmem:[%s168 + $0x40] sm:$0xff]
                %187 = vst [vmem:[%s169 + $0x40] sm:$0xff] %v186
                %v188 = vld [vmem:[%s168 + $0x48] sm:$0xff]
                %189 = vst [vmem:[%s169 + $0x48] sm:$0xff] %v188
                %v190 = vld [vmem:[%s168 + $0x50] sm:$0xff]
                %191 = vst [vmem:[%s169 + $0x50] sm:$0xff] %v190
                %v192 = vld [vmem:[%s168 + $0x58] sm:$0xff]
                %193 = vst [vmem:[%s169 + $0x58] sm:$0xff] %v192
                %v194 = vld [vmem:[%s168 + $0x60] sm:$0xff]
                %195 = vst [vmem:[%s169 + $0x60] sm:$0xff] %v194
                %v196 = vld [vmem:[%s168 + $0x68] sm:$0xff]
                %197 = vst [vmem:[%s169 + $0x68] sm:$0xff] %v196
                %v198 = vld [vmem:[%s168 + $0x70] sm:$0xff]
                %199 = vst [vmem:[%s169 + $0x70] sm:$0xff] %v198
                %v200 = vld [vmem:[%s168 + $0x78] sm:$0xff]
                %201 = vst [vmem:[%s169 + $0x78] sm:$0xff] %v200
                %v202 = vld [vmem:[%s168 + $0x80] sm:$0xff]
                %203 = vst [vmem:[%s169 + $0x80] sm:$0xff] %v202
                %v204 = vld [vmem:[%s168 + $0x88] sm:$0xff]
                %205 = vst [vmem:[%s169 + $0x88] sm:$0xff] %v204
                %v206 = vld [vmem:[%s168 + $0x90] sm:$0xff]
                %207 = vst [vmem:[%s169 + $0x90] sm:$0xff] %v206
                %v208 = vld [vmem:[%s168 + $0x98] sm:$0xff]
                %209 = vst [vmem:[%s169 + $0x98] sm:$0xff] %v208
                %v210 = vld [vmem:[%s168 + $0xa0] sm:$0xff]
                %211 = vst [vmem:[%s169 + $0xa0] sm:$0xff] %v210
                %v212 = vld [vmem:[%s168 + $0xa8] sm:$0xff]
                %213 = vst [vmem:[%s169 + $0xa8] sm:$0xff] %v212
                %v214 = vld [vmem:[%s168 + $0xb0] sm:$0xff]
                %215 = vst [vmem:[%s169 + $0xb0] sm:$0xff] %v214
                %v216 = vld [vmem:[%s168 + $0xb8] sm:$0xff]
                %217 = vst [vmem:[%s169 + $0xb8] sm:$0xff] %v216
                %v218 = vld [vmem:[%s168 + $0xc0] sm:$0xff]
                %219 = vst [vmem:[%s169 + $0xc0] sm:$0xff] %v218
                %v220 = vld [vmem:[%s168 + $0xc8] sm:$0xff]
                %221 = vst [vmem:[%s169 + $0xc8] sm:$0xff] %v220
                %v222 = vld [vmem:[%s168 + $0xd0] sm:$0xff]
                %223 = vst [vmem:[%s169 + $0xd0] sm:$0xff] %v222
                %v224 = vld [vmem:[%s168 + $0xd8] sm:$0xff]
                %225 = vst [vmem:[%s169 + $0xd8] sm:$0xff] %v224
                %v226 = vld [vmem:[%s168 + $0xe0] sm:$0xff]
                %227 = vst [vmem:[%s169 + $0xe0] sm:$0xff] %v226
                %v228 = vld [vmem:[%s168 + $0xe8] sm:$0xff]
                %229 = vst [vmem:[%s169 + $0xe8] sm:$0xff] %v228
                %v230 = vld [vmem:[%s168 + $0xf0] sm:$0xff]
                %231 = vst [vmem:[%s169 + $0xf0] sm:$0xff] %v230
                %v232 = vld [vmem:[%s168 + $0xf8] sm:$0xff]
                %233 = vst [vmem:[%s169 + $0xf8] sm:$0xff] %v232
                %v234 = vld [vmem:[%s168 + $0x3e8] sm:$0xff]
                %235 = vst [vmem:[%s169 + $0x100] sm:$0xff] %v234
                %v236 = vld [vmem:[%s168 + $0x3f0] sm:$0xff]
                %237 = vst [vmem:[%s169 + $0x108] sm:$0xff] %v236
                %v238 = vld [vmem:[%s168 + $0x3f8] sm:$0xff]
                %239 = vst [vmem:[%s169 + $0x110] sm:$0xff] %v238
                %v240 = vld [vmem:[%s168 + $0x400] sm:$0xff]
                %241 = vst [vmem:[%s169 + $0x118] sm:$0xff] %v240
                %v242 = vld [vmem:[%s168 + $0x408] sm:$0xff]
                %243 = vst [vmem:[%s169 + $0x120] sm:$0xff] %v242
                %v244 = vld [vmem:[%s168 + $0x410] sm:$0xff]
                %245 = vst [vmem:[%s169 + $0x128] sm:$0xff] %v244
                %v246 = vld [vmem:[%s168 + $0x418] sm:$0xff]
                %247 = vst [vmem:[%s169 + $0x130] sm:$0xff] %v246
                %v248 = vld [vmem:[%s168 + $0x420] sm:$0xff]
                %249 = vst [vmem:[%s169 + $0x138] sm:$0xff] %v248
                %v250 = vld [vmem:[%s168 + $0x428] sm:$0xff]
                %251 = vst [vmem:[%s169 + $0x140] sm:$0xff] %v250
                %v252 = vld [vmem:[%s168 + $0x430] sm:$0xff]
                %253 = vst [vmem:[%s169 + $0x148] sm:$0xff] %v252
                %v254 = vld [vmem:[%s168 + $0x438] sm:$0xff]
                %255 = vst [vmem:[%s169 + $0x150] sm:$0xff] %v254
                %v256 = vld [vmem:[%s168 + $0x440] sm:$0xff]
                %257 = vst [vmem:[%s169 + $0x158] sm:$0xff] %v256
                %v258 = vld [vmem:[%s168 + $0x448] sm:$0xff]
                %259 = vst [vmem:[%s169 + $0x160] sm:$0xff] %v258
                %v260 = vld [vmem:[%s168 + $0x450] sm:$0xff]
                %261 = vst [vmem:[%s169 + $0x168] sm:$0xff] %v260
                %v262 = vld [vmem:[%s168 + $0x458] sm:$0xff]
                %263 = vst [vmem:[%s169 + $0x170] sm:$0xff] %v262
                %v264 = vld [vmem:[%s168 + $0x460] sm:$0xff]
                %265 = vst [vmem:[%s169 + $0x178] sm:$0xff] %v264
                %v266 = vld [vmem:[%s168 + $0x468] sm:$0xff]
                %267 = vst [vmem:[%s169 + $0x180] sm:$0xff] %v266
                %v268 = vld [vmem:[%s168 + $0x470] sm:$0xff]
                %269 = vst [vmem:[%s169 + $0x188] sm:$0xff] %v268
                %v270 = vld [vmem:[%s168 + $0x478] sm:$0xff]
                %271 = vst [vmem:[%s169 + $0x190] sm:$0xff] %v270
                %v272 = vld [vmem:[%s168 + $0x480] sm:$0xff]
                %273 = vst [vmem:[%s169 + $0x198] sm:$0xff] %v272
                %v274 = vld [vmem:[%s168 + $0x488] sm:$0xff]
                %275 = vst [vmem:[%s169 + $0x1a0] sm:$0xff] %v274
                %v276 = vld [vmem:[%s168 + $0x490] sm:$0xff]
                %277 = vst [vmem:[%s169 + $0x1a8] sm:$0xff] %v276
                %v278 = vld [vmem:[%s168 + $0x498] sm:$0xff]
                %279 = vst [vmem:[%s169 + $0x1b0] sm:$0xff] %v278
                %v280 = vld [vmem:[%s168 + $0x4a0] sm:$0xff]
                %281 = vst [vmem:[%s169 + $0x1b8] sm:$0xff] %v280
                %v282 = vld [vmem:[%s168 + $0x4a8] sm:$0xff]
                %283 = vst [vmem:[%s169 + $0x1c0] sm:$0xff] %v282
                %v284 = vld [vmem:[%s168 + $0x4b0] sm:$0xff]
                %285 = vst [vmem:[%s169 + $0x1c8] sm:$0xff] %v284
                %v286 = vld [vmem:[%s168 + $0x4b8] sm:$0xff]
                %287 = vst [vmem:[%s169 + $0x1d0] sm:$0xff] %v286
                %v288 = vld [vmem:[%s168 + $0x4c0] sm:$0xff]
                %289 = vst [vmem:[%s169 + $0x1d8] sm:$0xff] %v288
                %v290 = vld [vmem:[%s168 + $0x4c8] sm:$0xff]
                %291 = vst [vmem:[%s169 + $0x1e0] sm:$0xff] %v290
                %v292 = vld [vmem:[%s168 + $0x4d0] sm:$0xff]
                %293 = vst [vmem:[%s169 + $0x1e8] sm:$0xff] %v292
                %v294 = vld [vmem:[%s168 + $0x4d8] sm:$0xff]
                %295 = vst [vmem:[%s169 + $0x1f0] sm:$0xff] %v294
                %v296 = vld [vmem:[%s168 + $0x4e0] sm:$0xff]
                %297 = vst [vmem:[%s169 + $0x1f8] sm:$0xff] %v296
                %s298 = sadd.s32 1, %s167
                %p299 = scmp.ge.s32.totalorder %s298, %s160
                %s300 = scalar_select %p299, 0, %s298
                %s301 = smul.u32 %s300, 256
                %s302 = smul.u32 %s300, 256
                %s303 = scalar_lea.vmem %s151, %s301
                %s304 = scalar_lea.vmem %s139, %s302 [#allocation2]
              $region37: #{tpu_custom_call.1} parent=31 // loop_footer
                %s164 = sadd.s32 %s162, 1
              $region38: #{tpu_custom_call.1} parent=31 // loop_footer_branch
                %161 = sbr.rel target = $region34
              $region39: #{tpu_custom_call.1} parent=31 // loop_exit
                _
              %s305 = sshrl.u32 %s147, 5
              %s306 = sand.u32 %s147, 31
              %s307 = smul.u32 %s305, 32
              %s308 = smul.u32 8, %s307
              %s309 = scalar_lea.vmem %s151, %s308
              %s310 = smul.u32 8, %s307
              %s311 = scalar_lea.vmem %s139, %s310 [#allocation2]
              // While loop
              $region40: #{tpu_custom_call.1} parent=31 // loop_pre_header
                _
              $region41: #{tpu_custom_call.1} parent=31 // loop_header
                %s313 = sphi 0, %s315
                %p314 = scmp.ge.s32.totalorder %s313, %s306
                %s318 = sphi 0, %s327
                %s319 = sphi %s309, %s330
                %s320 = sphi %s311, %s331
              $region42: #{tpu_custom_call.1} parent=31 // loop_header_branch
                %317 = sbr.rel (%p314) target = $region46
              $region43: #{tpu_custom_call.1} parent=31 // loop_body
                %v321 = vld [vmem:[%s319] sm:$0xff]
                %322 = vst [vmem:[%s320] sm:$0xff] %v321
                %v323 = vld [vmem:[%s319 + $0x3e8] sm:$0xff]
                %324 = vst [vmem:[%s320 + $0x100] sm:$0xff] %v323
                %s325 = sadd.s32 1, %s318
                %p326 = scmp.ge.s32.totalorder %s325, %s306
                %s327 = scalar_select %p326, 0, %s325
                %s328 = smul.u32 %s327, 8
                %s329 = smul.u32 %s327, 8
                %s330 = scalar_lea.vmem %s309, %s328
                %s331 = scalar_lea.vmem %s311, %s329 [#allocation2]
              $region44: #{tpu_custom_call.1} parent=31 // loop_footer
                %s315 = sadd.s32 %s313, 1
              $region45: #{tpu_custom_call.1} parent=31 // loop_footer_branch
                %312 = sbr.rel target = $region41
              $region46: #{tpu_custom_call.1} parent=31 // loop_exit
                _
            $region32: #{tpu_custom_call.1} parent=23 // pred_fallthru
              _
          $region24: #{tpu_custom_call.1} parent=19 // pred_fallthru
            _
          %508 = vnop
        $region20: #{tpu_custom_call.1} parent=15 // pred_fallthru
          _
        // Predicated region
        $region69: #{tpu_custom_call.1} parent=15 // pred_check
          %p509 = pneg %p82
        $region70: #{tpu_custom_call.1} parent=15 // pred_check_branch
          %511 = sbr.rel (%p509) target = $region72
        $region71: #{tpu_custom_call.1} parent=15 // pred_region
          %s512 = sand.u32 %s72, 1
          %s513 = sand.u32 %s72, 1
          %s514 = smul.addr %s513, 512
          %s515 = scalar_lea.vmem [#allocation3], %s514
          %s516 = smul.u32 %s15, 2
          %s517 = sadd.s32 %s516, %s16
          %p518 = scmp.lt.s32.totalorder %s517, 3
          %s519 = scalar_select %p518, %s517, 3
          %s520 = smul.u32 32, %s519
          %s521 = ssub.s32 125, %s520
          %p522 = scmp.lt.s32.totalorder %s521, 32
          %s523 = scalar_select %p522, %s521, 32
          %s524 = smul.u32 256, %s523
          %p525 = scmp.ne.s32.totalorder 0, %s524
          %s526 = smul.addr %s520, 8
          %s527 = scalar_lea.vmem %s1, %s526
          // Predicated region
          $region73: #{tpu_custom_call.1} parent=71 // pred_check
            %p528 = pneg %p525
          $region74: #{tpu_custom_call.1} parent=71 // pred_check_branch
            %530 = sbr.rel (%p528) target = $region76
          $region75: #{tpu_custom_call.1} parent=71 // pred_region
            // Predicated region
            $region77: #{tpu_custom_call.1} parent=75 // pred_check
              _
            $region78: #{tpu_custom_call.1} parent=75 // pred_check_branch
              %532 = sbr.rel (0) target = $region80
            $region79: #{tpu_custom_call.1} parent=75 // pred_region
              // Predicated region
              $region99: #{tpu_custom_call.1} parent=79 // pred_check
                _
              $region100: #{tpu_custom_call.1} parent=79 // pred_check_branch
                %709 = sbr.rel (0) target = $region102
              $region101: #{tpu_custom_call.1} parent=79 // pred_region
                %s710 = sshrl.u32 %s523, 5
                // While loop
                $region103: #{tpu_custom_call.1} parent=101 // loop_pre_header
                  _
                $region104: #{tpu_custom_call.1} parent=101 // loop_header
                  %s712 = sphi 0, %s714
                  %p713 = scmp.ge.s32.totalorder %s712, %s710
                  %s717 = sphi 0, %s850
                  %s718 = sphi %s527, %s853
                  %s719 = sphi %s515, %s854
                $region105: #{tpu_custom_call.1} parent=101 // loop_header_branch
                  %716 = sbr.rel (%p713) target = $region109
                $region106: #{tpu_custom_call.1} parent=101 // loop_body
                  %v720 = vld [vmem:[%s718] sm:$0xff]
                  %721 = vst [vmem:[%s719] sm:$0xff] %v720
                  %v722 = vld [vmem:[%s718 + $0x8] sm:$0xff]
                  %723 = vst [vmem:[%s719 + $0x8] sm:$0xff] %v722
                  %v724 = vld [vmem:[%s718 + $0x10] sm:$0xff]
                  %725 = vst [vmem:[%s719 + $0x10] sm:$0xff] %v724
                  %v726 = vld [vmem:[%s718 + $0x18] sm:$0xff]
                  %727 = vst [vmem:[%s719 + $0x18] sm:$0xff] %v726
                  %v728 = vld [vmem:[%s718 + $0x20] sm:$0xff]
                  %729 = vst [vmem:[%s719 + $0x20] sm:$0xff] %v728
                  %v730 = vld [vmem:[%s718 + $0x28] sm:$0xff]
                  %731 = vst [vmem:[%s719 + $0x28] sm:$0xff] %v730
                  %v732 = vld [vmem:[%s718 + $0x30] sm:$0xff]
                  %733 = vst [vmem:[%s719 + $0x30] sm:$0xff] %v732
                  %v734 = vld [vmem:[%s718 + $0x38] sm:$0xff]
                  %735 = vst [vmem:[%s719 + $0x38] sm:$0xff] %v734
                  %v736 = vld [vmem:[%s718 + $0x40] sm:$0xff]
                  %737 = vst [vmem:[%s719 + $0x40] sm:$0xff] %v736
                  %v738 = vld [vmem:[%s718 + $0x48] sm:$0xff]
                  %739 = vst [vmem:[%s719 + $0x48] sm:$0xff] %v738
                  %v740 = vld [vmem:[%s718 + $0x50] sm:$0xff]
                  %741 = vst [vmem:[%s719 + $0x50] sm:$0xff] %v740
                  %v742 = vld [vmem:[%s718 + $0x58] sm:$0xff]
                  %743 = vst [vmem:[%s719 + $0x58] sm:$0xff] %v742
                  %v744 = vld [vmem:[%s718 + $0x60] sm:$0xff]
                  %745 = vst [vmem:[%s719 + $0x60] sm:$0xff] %v744
                  %v746 = vld [vmem:[%s718 + $0x68] sm:$0xff]
                  %747 = vst [vmem:[%s719 + $0x68] sm:$0xff] %v746
                  %v748 = vld [vmem:[%s718 + $0x70] sm:$0xff]
                  %749 = vst [vmem:[%s719 + $0x70] sm:$0xff] %v748
                  %v750 = vld [vmem:[%s718 + $0x78] sm:$0xff]
                  %751 = vst [vmem:[%s719 + $0x78] sm:$0xff] %v750
                  %v752 = vld [vmem:[%s718 + $0x80] sm:$0xff]
                  %753 = vst [vmem:[%s719 + $0x80] sm:$0xff] %v752
                  %v754 = vld [vmem:[%s718 + $0x88] sm:$0xff]
                  %755 = vst [vmem:[%s719 + $0x88] sm:$0xff] %v754
                  %v756 = vld [vmem:[%s718 + $0x90] sm:$0xff]
                  %757 = vst [vmem:[%s719 + $0x90] sm:$0xff] %v756
                  %v758 = vld [vmem:[%s718 + $0x98] sm:$0xff]
                  %759 = vst [vmem:[%s719 + $0x98] sm:$0xff] %v758
                  %v760 = vld [vmem:[%s718 + $0xa0] sm:$0xff]
                  %761 = vst [vmem:[%s719 + $0xa0] sm:$0xff] %v760
                  %v762 = vld [vmem:[%s718 + $0xa8] sm:$0xff]
                  %763 = vst [vmem:[%s719 + $0xa8] sm:$0xff] %v762
                  %v764 = vld [vmem:[%s718 + $0xb0] sm:$0xff]
                  %765 = vst [vmem:[%s719 + $0xb0] sm:$0xff] %v764
                  %v766 = vld [vmem:[%s718 + $0xb8] sm:$0xff]
                  %767 = vst [vmem:[%s719 + $0xb8] sm:$0xff] %v766
                  %v768 = vld [vmem:[%s718 + $0xc0] sm:$0xff]
                  %769 = vst [vmem:[%s719 + $0xc0] sm:$0xff] %v768
                  %v770 = vld [vmem:[%s718 + $0xc8] sm:$0xff]
                  %771 = vst [vmem:[%s719 + $0xc8] sm:$0xff] %v770
                  %v772 = vld [vmem:[%s718 + $0xd0] sm:$0xff]
                  %773 = vst [vmem:[%s719 + $0xd0] sm:$0xff] %v772
                  %v774 = vld [vmem:[%s718 + $0xd8] sm:$0xff]
                  %775 = vst [vmem:[%s719 + $0xd8] sm:$0xff] %v774
                  %v776 = vld [vmem:[%s718 + $0xe0] sm:$0xff]
                  %777 = vst [vmem:[%s719 + $0xe0] sm:$0xff] %v776
                  %v778 = vld [vmem:[%s718 + $0xe8] sm:$0xff]
                  %779 = vst [vmem:[%s719 + $0xe8] sm:$0xff] %v778
                  %v780 = vld [vmem:[%s718 + $0xf0] sm:$0xff]
                  %781 = vst [vmem:[%s719 + $0xf0] sm:$0xff] %v780
                  %v782 = vld [vmem:[%s718 + $0xf8] sm:$0xff]
                  %783 = vst [vmem:[%s719 + $0xf8] sm:$0xff] %v782
                  %v784 = vld [vmem:[%s718 + $0x3e8] sm:$0xff]
                  %785 = vst [vmem:[%s719 + $0x100] sm:$0xff] %v784
                  %v786 = vld [vmem:[%s718 + $0x3f0] sm:$0xff]
                  %787 = vst [vmem:[%s719 + $0x108] sm:$0xff] %v786
                  %v788 = vld [vmem:[%s718 + $0x3f8] sm:$0xff]
                  %789 = vst [vmem:[%s719 + $0x110] sm:$0xff] %v788
                  %v790 = vld [vmem:[%s718 + $0x400] sm:$0xff]
                  %791 = vst [vmem:[%s719 + $0x118] sm:$0xff] %v790
                  %v792 = vld [vmem:[%s718 + $0x408] sm:$0xff]
                  %793 = vst [vmem:[%s719 + $0x120] sm:$0xff] %v792
                  %v794 = vld [vmem:[%s718 + $0x410] sm:$0xff]
                  %795 = vst [vmem:[%s719 + $0x128] sm:$0xff] %v794
                  %v796 = vld [vmem:[%s718 + $0x418] sm:$0xff]
                  %797 = vst [vmem:[%s719 + $0x130] sm:$0xff] %v796
                  %v798 = vld [vmem:[%s718 + $0x420] sm:$0xff]
                  %799 = vst [vmem:[%s719 + $0x138] sm:$0xff] %v798
                  %v800 = vld [vmem:[%s718 + $0x428] sm:$0xff]
                  %801 = vst [vmem:[%s719 + $0x140] sm:$0xff] %v800
                  %v802 = vld [vmem:[%s718 + $0x430] sm:$0xff]
                  %803 = vst [vmem:[%s719 + $0x148] sm:$0xff] %v802
                  %v804 = vld [vmem:[%s718 + $0x438] sm:$0xff]
                  %805 = vst [vmem:[%s719 + $0x150] sm:$0xff] %v804
                  %v806 = vld [vmem:[%s718 + $0x440] sm:$0xff]
                  %807 = vst [vmem:[%s719 + $0x158] sm:$0xff] %v806
                  %v808 = vld [vmem:[%s718 + $0x448] sm:$0xff]
                  %809 = vst [vmem:[%s719 + $0x160] sm:$0xff] %v808
                  %v810 = vld [vmem:[%s718 + $0x450] sm:$0xff]
                  %811 = vst [vmem:[%s719 + $0x168] sm:$0xff] %v810
                  %v812 = vld [vmem:[%s718 + $0x458] sm:$0xff]
                  %813 = vst [vmem:[%s719 + $0x170] sm:$0xff] %v812
                  %v814 = vld [vmem:[%s718 + $0x460] sm:$0xff]
                  %815 = vst [vmem:[%s719 + $0x178] sm:$0xff] %v814
                  %v816 = vld [vmem:[%s718 + $0x468] sm:$0xff]
                  %817 = vst [vmem:[%s719 + $0x180] sm:$0xff] %v816
                  %v818 = vld [vmem:[%s718 + $0x470] sm:$0xff]
                  %819 = vst [vmem:[%s719 + $0x188] sm:$0xff] %v818
                  %v820 = vld [vmem:[%s718 + $0x478] sm:$0xff]
                  %821 = vst [vmem:[%s719 + $0x190] sm:$0xff] %v820
                  %v822 = vld [vmem:[%s718 + $0x480] sm:$0xff]
                  %823 = vst [vmem:[%s719 + $0x198] sm:$0xff] %v822
                  %v824 = vld [vmem:[%s718 + $0x488] sm:$0xff]
                  %825 = vst [vmem:[%s719 + $0x1a0] sm:$0xff] %v824
                  %v826 = vld [vmem:[%s718 + $0x490] sm:$0xff]
                  %827 = vst [vmem:[%s719 + $0x1a8] sm:$0xff] %v826
                  %v828 = vld [vmem:[%s718 + $0x498] sm:$0xff]
                  %829 = vst [vmem:[%s719 + $0x1b0] sm:$0xff] %v828
                  %v830 = vld [vmem:[%s718 + $0x4a0] sm:$0xff]
                  %831 = vst [vmem:[%s719 + $0x1b8] sm:$0xff] %v830
                  %v832 = vld [vmem:[%s718 + $0x4a8] sm:$0xff]
                  %833 = vst [vmem:[%s719 + $0x1c0] sm:$0xff] %v832
                  %v834 = vld [vmem:[%s718 + $0x4b0] sm:$0xff]
                  %835 = vst [vmem:[%s719 + $0x1c8] sm:$0xff] %v834
                  %v836 = vld [vmem:[%s718 + $0x4b8] sm:$0xff]
                  %837 = vst [vmem:[%s719 + $0x1d0] sm:$0xff] %v836
                  %v838 = vld [vmem:[%s718 + $0x4c0] sm:$0xff]
                  %839 = vst [vmem:[%s719 + $0x1d8] sm:$0xff] %v838
                  %v840 = vld [vmem:[%s718 + $0x4c8] sm:$0xff]
                  %841 = vst [vmem:[%s719 + $0x1e0] sm:$0xff] %v840
                  %v842 = vld [vmem:[%s718 + $0x4d0] sm:$0xff]
                  %843 = vst [vmem:[%s719 + $0x1e8] sm:$0xff] %v842
                  %v844 = vld [vmem:[%s718 + $0x4d8] sm:$0xff]
                  %845 = vst [vmem:[%s719 + $0x1f0] sm:$0xff] %v844
                  %v846 = vld [vmem:[%s718 + $0x4e0] sm:$0xff]
                  %847 = vst [vmem:[%s719 + $0x1f8] sm:$0xff] %v846
                  %s848 = sadd.s32 1, %s717
                  %p849 = scmp.ge.s32.totalorder %s848, %s710
                  %s850 = scalar_select %p849, 0, %s848
                  %s851 = smul.u32 %s850, 256
                  %s852 = smul.u32 %s850, 256
                  %s853 = scalar_lea.vmem %s527, %s851
                  %s854 = scalar_lea.vmem %s515, %s852 [#allocation3]
                $region107: #{tpu_custom_call.1} parent=101 // loop_footer
                  %s714 = sadd.s32 %s712, 1
                $region108: #{tpu_custom_call.1} parent=101 // loop_footer_branch
                  %711 = sbr.rel target = $region104
                $region109: #{tpu_custom_call.1} parent=101 // loop_exit
                  _
                %s855 = sshrl.u32 %s523, 5
                %s856 = sand.u32 %s523, 31
                %s857 = smul.u32 %s855, 32
                %s858 = smul.u32 8, %s857
                %s859 = scalar_lea.vmem %s527, %s858
                %s860 = smul.u32 8, %s857
                %s861 = scalar_lea.vmem %s515, %s860 [#allocation3]
                // While loop
                $region110: #{tpu_custom_call.1} parent=101 // loop_pre_header
                  _
                $region111: #{tpu_custom_call.1} parent=101 // loop_header
                  %s863 = sphi 0, %s865
                  %p864 = scmp.ge.s32.totalorder %s863, %s856
                  %s868 = sphi 0, %s877
                  %s869 = sphi %s859, %s880
                  %s870 = sphi %s861, %s881
                $region112: #{tpu_custom_call.1} parent=101 // loop_header_branch
                  %867 = sbr.rel (%p864) target = $region116
                $region113: #{tpu_custom_call.1} parent=101 // loop_body
                  %v871 = vld [vmem:[%s869] sm:$0xff]
                  %872 = vst [vmem:[%s870] sm:$0xff] %v871
                  %v873 = vld [vmem:[%s869 + $0x3e8] sm:$0xff]
                  %874 = vst [vmem:[%s870 + $0x100] sm:$0xff] %v873
                  %s875 = sadd.s32 1, %s868
                  %p876 = scmp.ge.s32.totalorder %s875, %s856
                  %s877 = scalar_select %p876, 0, %s875
                  %s878 = smul.u32 %s877, 8
                  %s879 = smul.u32 %s877, 8
                  %s880 = scalar_lea.vmem %s859, %s878
                  %s881 = scalar_lea.vmem %s861, %s879 [#allocation3]
                $region114: #{tpu_custom_call.1} parent=101 // loop_footer
                  %s865 = sadd.s32 %s863, 1
                $region115: #{tpu_custom_call.1} parent=101 // loop_footer_branch
                  %862 = sbr.rel target = $region111
                $region116: #{tpu_custom_call.1} parent=101 // loop_exit
                  _
              $region102: #{tpu_custom_call.1} parent=79 // pred_fallthru
                _
              // Predicated region
              $region117: #{tpu_custom_call.1} parent=79 // pred_check
                _
              $region118: #{tpu_custom_call.1} parent=79 // pred_check_branch
                %883 = sbr.rel target = $region120
              $region119: #{tpu_custom_call.1} parent=79 // pred_region
                _
              $region120: #{tpu_custom_call.1} parent=79 // pred_fallthru
                _
            $region80: #{tpu_custom_call.1} parent=75 // pred_fallthru
              _
            // Predicated region
            $region81: #{tpu_custom_call.1} parent=75 // pred_check
              _
            $region82: #{tpu_custom_call.1} parent=75 // pred_check_branch
              %534 = sbr.rel target = $region84
            $region83: #{tpu_custom_call.1} parent=75 // pred_region
              %s536 = sshrl.u32 %s523, 5
              // While loop
              $region85: #{tpu_custom_call.1} parent=83 // loop_pre_header
                _
              $region86: #{tpu_custom_call.1} parent=83 // loop_header
                %s538 = sphi 0, %s540
                %p539 = scmp.ge.s32.totalorder %s538, %s536
                %s543 = sphi 0, %s676
                %s544 = sphi %s527, %s679
                %s545 = sphi %s515, %s680
              $region87: #{tpu_custom_call.1} parent=83 // loop_header_branch
                %542 = sbr.rel (%p539) target = $region91
              $region88: #{tpu_custom_call.1} parent=83 // loop_body
                %v546 = vld [vmem:[%s544] sm:$0xff]
                %547 = vst [vmem:[%s545] sm:$0xff] %v546
                %v548 = vld [vmem:[%s544 + $0x8] sm:$0xff]
                %549 = vst [vmem:[%s545 + $0x8] sm:$0xff] %v548
                %v550 = vld [vmem:[%s544 + $0x10] sm:$0xff]
                %551 = vst [vmem:[%s545 + $0x10] sm:$0xff] %v550
                %v552 = vld [vmem:[%s544 + $0x18] sm:$0xff]
                %553 = vst [vmem:[%s545 + $0x18] sm:$0xff] %v552
                %v554 = vld [vmem:[%s544 + $0x20] sm:$0xff]
                %555 = vst [vmem:[%s545 + $0x20] sm:$0xff] %v554
                %v556 = vld [vmem:[%s544 + $0x28] sm:$0xff]
                %557 = vst [vmem:[%s545 + $0x28] sm:$0xff] %v556
                %v558 = vld [vmem:[%s544 + $0x30] sm:$0xff]
                %559 = vst [vmem:[%s545 + $0x30] sm:$0xff] %v558
                %v560 = vld [vmem:[%s544 + $0x38] sm:$0xff]
                %561 = vst [vmem:[%s545 + $0x38] sm:$0xff] %v560
                %v562 = vld [vmem:[%s544 + $0x40] sm:$0xff]
                %563 = vst [vmem:[%s545 + $0x40] sm:$0xff] %v562
                %v564 = vld [vmem:[%s544 + $0x48] sm:$0xff]
                %565 = vst [vmem:[%s545 + $0x48] sm:$0xff] %v564
                %v566 = vld [vmem:[%s544 + $0x50] sm:$0xff]
                %567 = vst [vmem:[%s545 + $0x50] sm:$0xff] %v566
                %v568 = vld [vmem:[%s544 + $0x58] sm:$0xff]
                %569 = vst [vmem:[%s545 + $0x58] sm:$0xff] %v568
                %v570 = vld [vmem:[%s544 + $0x60] sm:$0xff]
                %571 = vst [vmem:[%s545 + $0x60] sm:$0xff] %v570
                %v572 = vld [vmem:[%s544 + $0x68] sm:$0xff]
                %573 = vst [vmem:[%s545 + $0x68] sm:$0xff] %v572
                %v574 = vld [vmem:[%s544 + $0x70] sm:$0xff]
                %575 = vst [vmem:[%s545 + $0x70] sm:$0xff] %v574
                %v576 = vld [vmem:[%s544 + $0x78] sm:$0xff]
                %577 = vst [vmem:[%s545 + $0x78] sm:$0xff] %v576
                %v578 = vld [vmem:[%s544 + $0x80] sm:$0xff]
                %579 = vst [vmem:[%s545 + $0x80] sm:$0xff] %v578
                %v580 = vld [vmem:[%s544 + $0x88] sm:$0xff]
                %581 = vst [vmem:[%s545 + $0x88] sm:$0xff] %v580
                %v582 = vld [vmem:[%s544 + $0x90] sm:$0xff]
                %583 = vst [vmem:[%s545 + $0x90] sm:$0xff] %v582
                %v584 = vld [vmem:[%s544 + $0x98] sm:$0xff]
                %585 = vst [vmem:[%s545 + $0x98] sm:$0xff] %v584
                %v586 = vld [vmem:[%s544 + $0xa0] sm:$0xff]
                %587 = vst [vmem:[%s545 + $0xa0] sm:$0xff] %v586
                %v588 = vld [vmem:[%s544 + $0xa8] sm:$0xff]
                %589 = vst [vmem:[%s545 + $0xa8] sm:$0xff] %v588
                %v590 = vld [vmem:[%s544 + $0xb0] sm:$0xff]
                %591 = vst [vmem:[%s545 + $0xb0] sm:$0xff] %v590
                %v592 = vld [vmem:[%s544 + $0xb8] sm:$0xff]
                %593 = vst [vmem:[%s545 + $0xb8] sm:$0xff] %v592
                %v594 = vld [vmem:[%s544 + $0xc0] sm:$0xff]
                %595 = vst [vmem:[%s545 + $0xc0] sm:$0xff] %v594
                %v596 = vld [vmem:[%s544 + $0xc8] sm:$0xff]
                %597 = vst [vmem:[%s545 + $0xc8] sm:$0xff] %v596
                %v598 = vld [vmem:[%s544 + $0xd0] sm:$0xff]
                %599 = vst [vmem:[%s545 + $0xd0] sm:$0xff] %v598
                %v600 = vld [vmem:[%s544 + $0xd8] sm:$0xff]
                %601 = vst [vmem:[%s545 + $0xd8] sm:$0xff] %v600
                %v602 = vld [vmem:[%s544 + $0xe0] sm:$0xff]
                %603 = vst [vmem:[%s545 + $0xe0] sm:$0xff] %v602
                %v604 = vld [vmem:[%s544 + $0xe8] sm:$0xff]
                %605 = vst [vmem:[%s545 + $0xe8] sm:$0xff] %v604
                %v606 = vld [vmem:[%s544 + $0xf0] sm:$0xff]
                %607 = vst [vmem:[%s545 + $0xf0] sm:$0xff] %v606
                %v608 = vld [vmem:[%s544 + $0xf8] sm:$0xff]
                %609 = vst [vmem:[%s545 + $0xf8] sm:$0xff] %v608
                %v610 = vld [vmem:[%s544 + $0x3e8] sm:$0xff]
                %611 = vst [vmem:[%s545 + $0x100] sm:$0xff] %v610
                %v612 = vld [vmem:[%s544 + $0x3f0] sm:$0xff]
                %613 = vst [vmem:[%s545 + $0x108] sm:$0xff] %v612
                %v614 = vld [vmem:[%s544 + $0x3f8] sm:$0xff]
                %615 = vst [vmem:[%s545 + $0x110] sm:$0xff] %v614
                %v616 = vld [vmem:[%s544 + $0x400] sm:$0xff]
                %617 = vst [vmem:[%s545 + $0x118] sm:$0xff] %v616
                %v618 = vld [vmem:[%s544 + $0x408] sm:$0xff]
                %619 = vst [vmem:[%s545 + $0x120] sm:$0xff] %v618
                %v620 = vld [vmem:[%s544 + $0x410] sm:$0xff]
                %621 = vst [vmem:[%s545 + $0x128] sm:$0xff] %v620
                %v622 = vld [vmem:[%s544 + $0x418] sm:$0xff]
                %623 = vst [vmem:[%s545 + $0x130] sm:$0xff] %v622
                %v624 = vld [vmem:[%s544 + $0x420] sm:$0xff]
                %625 = vst [vmem:[%s545 + $0x138] sm:$0xff] %v624
                %v626 = vld [vmem:[%s544 + $0x428] sm:$0xff]
                %627 = vst [vmem:[%s545 + $0x140] sm:$0xff] %v626
                %v628 = vld [vmem:[%s544 + $0x430] sm:$0xff]
                %629 = vst [vmem:[%s545 + $0x148] sm:$0xff] %v628
                %v630 = vld [vmem:[%s544 + $0x438] sm:$0xff]
                %631 = vst [vmem:[%s545 + $0x150] sm:$0xff] %v630
                %v632 = vld [vmem:[%s544 + $0x440] sm:$0xff]
                %633 = vst [vmem:[%s545 + $0x158] sm:$0xff] %v632
                %v634 = vld [vmem:[%s544 + $0x448] sm:$0xff]
                %635 = vst [vmem:[%s545 + $0x160] sm:$0xff] %v634
                %v636 = vld [vmem:[%s544 + $0x450] sm:$0xff]
                %637 = vst [vmem:[%s545 + $0x168] sm:$0xff] %v636
                %v638 = vld [vmem:[%s544 + $0x458] sm:$0xff]
                %639 = vst [vmem:[%s545 + $0x170] sm:$0xff] %v638
                %v640 = vld [vmem:[%s544 + $0x460] sm:$0xff]
                %641 = vst [vmem:[%s545 + $0x178] sm:$0xff] %v640
                %v642 = vld [vmem:[%s544 + $0x468] sm:$0xff]
                %643 = vst [vmem:[%s545 + $0x180] sm:$0xff] %v642
                %v644 = vld [vmem:[%s544 + $0x470] sm:$0xff]
                %645 = vst [vmem:[%s545 + $0x188] sm:$0xff] %v644
                %v646 = vld [vmem:[%s544 + $0x478] sm:$0xff]
                %647 = vst [vmem:[%s545 + $0x190] sm:$0xff] %v646
                %v648 = vld [vmem:[%s544 + $0x480] sm:$0xff]
                %649 = vst [vmem:[%s545 + $0x198] sm:$0xff] %v648
                %v650 = vld [vmem:[%s544 + $0x488] sm:$0xff]
                %651 = vst [vmem:[%s545 + $0x1a0] sm:$0xff] %v650
                %v652 = vld [vmem:[%s544 + $0x490] sm:$0xff]
                %653 = vst [vmem:[%s545 + $0x1a8] sm:$0xff] %v652
                %v654 = vld [vmem:[%s544 + $0x498] sm:$0xff]
                %655 = vst [vmem:[%s545 + $0x1b0] sm:$0xff] %v654
                %v656 = vld [vmem:[%s544 + $0x4a0] sm:$0xff]
                %657 = vst [vmem:[%s545 + $0x1b8] sm:$0xff] %v656
                %v658 = vld [vmem:[%s544 + $0x4a8] sm:$0xff]
                %659 = vst [vmem:[%s545 + $0x1c0] sm:$0xff] %v658
                %v660 = vld [vmem:[%s544 + $0x4b0] sm:$0xff]
                %661 = vst [vmem:[%s545 + $0x1c8] sm:$0xff] %v660
                %v662 = vld [vmem:[%s544 + $0x4b8] sm:$0xff]
                %663 = vst [vmem:[%s545 + $0x1d0] sm:$0xff] %v662
                %v664 = vld [vmem:[%s544 + $0x4c0] sm:$0xff]
                %665 = vst [vmem:[%s545 + $0x1d8] sm:$0xff] %v664
                %v666 = vld [vmem:[%s544 + $0x4c8] sm:$0xff]
                %667 = vst [vmem:[%s545 + $0x1e0] sm:$0xff] %v666
                %v668 = vld [vmem:[%s544 + $0x4d0] sm:$0xff]
                %669 = vst [vmem:[%s545 + $0x1e8] sm:$0xff] %v668
                %v670 = vld [vmem:[%s544 + $0x4d8] sm:$0xff]
                %671 = vst [vmem:[%s545 + $0x1f0] sm:$0xff] %v670
                %v672 = vld [vmem:[%s544 + $0x4e0] sm:$0xff]
                %673 = vst [vmem:[%s545 + $0x1f8] sm:$0xff] %v672
                %s674 = sadd.s32 1, %s543
                %p675 = scmp.ge.s32.totalorder %s674, %s536
                %s676 = scalar_select %p675, 0, %s674
                %s677 = smul.u32 %s676, 256
                %s678 = smul.u32 %s676, 256
                %s679 = scalar_lea.vmem %s527, %s677
                %s680 = scalar_lea.vmem %s515, %s678 [#allocation3]
              $region89: #{tpu_custom_call.1} parent=83 // loop_footer
                %s540 = sadd.s32 %s538, 1
              $region90: #{tpu_custom_call.1} parent=83 // loop_footer_branch
                %537 = sbr.rel target = $region86
              $region91: #{tpu_custom_call.1} parent=83 // loop_exit
                _
              %s681 = sshrl.u32 %s523, 5
              %s682 = sand.u32 %s523, 31
              %s683 = smul.u32 %s681, 32
              %s684 = smul.u32 8, %s683
              %s685 = scalar_lea.vmem %s527, %s684
              %s686 = smul.u32 8, %s683
              %s687 = scalar_lea.vmem %s515, %s686 [#allocation3]
              // While loop
              $region92: #{tpu_custom_call.1} parent=83 // loop_pre_header
                _
              $region93: #{tpu_custom_call.1} parent=83 // loop_header
                %s689 = sphi 0, %s691
                %p690 = scmp.ge.s32.totalorder %s689, %s682
                %s694 = sphi 0, %s703
                %s695 = sphi %s685, %s706
                %s696 = sphi %s687, %s707
              $region94: #{tpu_custom_call.1} parent=83 // loop_header_branch
                %693 = sbr.rel (%p690) target = $region98
              $region95: #{tpu_custom_call.1} parent=83 // loop_body
                %v697 = vld [vmem:[%s695] sm:$0xff]
                %698 = vst [vmem:[%s696] sm:$0xff] %v697
                %v699 = vld [vmem:[%s695 + $0x3e8] sm:$0xff]
                %700 = vst [vmem:[%s696 + $0x100] sm:$0xff] %v699
                %s701 = sadd.s32 1, %s694
                %p702 = scmp.ge.s32.totalorder %s701, %s682
                %s703 = scalar_select %p702, 0, %s701
                %s704 = smul.u32 %s703, 8
                %s705 = smul.u32 %s703, 8
                %s706 = scalar_lea.vmem %s685, %s704
                %s707 = scalar_lea.vmem %s687, %s705 [#allocation3]
              $region96: #{tpu_custom_call.1} parent=83 // loop_footer
                %s691 = sadd.s32 %s689, 1
              $region97: #{tpu_custom_call.1} parent=83 // loop_footer_branch
                %688 = sbr.rel target = $region93
              $region98: #{tpu_custom_call.1} parent=83 // loop_exit
                _
            $region84: #{tpu_custom_call.1} parent=75 // pred_fallthru
              _
          $region76: #{tpu_custom_call.1} parent=71 // pred_fallthru
            _
          %884 = vnop
        $region72: #{tpu_custom_call.1} parent=15 // pred_fallthru
          _
      $region16: #{tpu_custom_call.1} parent=5 // pred_fallthru
        _
      %p885 = scmp.le.s32.totalorder 1, %s8
      %p886 = scmp.lt.s32.totalorder %s8, 5
      %p887 = pnand %p885, %p886
      %p888 = pneg %p887
      // Predicated region
      $region121: #{tpu_custom_call.1} parent=5 // pred_check
        _
      $region122: #{tpu_custom_call.1} parent=5 // pred_check_branch
        %890 = sbr.rel (%p887) target = $region124
      $region123: #{tpu_custom_call.1} parent=5 // pred_region
        %s891 = ssub.s32 %s8, 1
        %s892 = sand.u32 %s41, 1
        %s893 = sand.u32 %s41, 1
        %s894 = smul.addr %s893, 512
        %s895 = scalar_lea.vmem [#allocation2], %s894
        // Predicated region
        $region125: #{tpu_custom_call.1} parent=123 // pred_check
          %p896 = pneg %p54
        $region126: #{tpu_custom_call.1} parent=123 // pred_check_branch
          %898 = sbr.rel (%p896) target = $region128
        $region127: #{tpu_custom_call.1} parent=123 // pred_region
          _
        $region128: #{tpu_custom_call.1} parent=123 // pred_fallthru
          _
        %s899 = sand.u32 %s75, 1
        %s900 = sand.u32 %s75, 1
        %s901 = smul.addr %s900, 512
        %s902 = scalar_lea.vmem [#allocation3], %s901
        // Predicated region
        $region129: #{tpu_custom_call.1} parent=123 // pred_check
          %p903 = pneg %p88
        $region130: #{tpu_custom_call.1} parent=123 // pred_check_branch
          %905 = sbr.rel (%p903) target = $region132
        $region131: #{tpu_custom_call.1} parent=123 // pred_region
          _
        $region132: #{tpu_custom_call.1} parent=123 // pred_fallthru
          _
        %s906 = sand.u32 %s41, 1
        %s907 = sand.u32 %s41, 1
        %s908 = smul.addr %s907, 512
        %s909 = scalar_lea.vmem [#allocation2], %s908
        %p910 = pneg %p54
        %p911 = pneg %p51
        %s912 = sand.u32 %s75, 1
        %s913 = sand.u32 %s75, 1
        %s914 = smul.addr %s913, 512
        %s915 = scalar_lea.vmem [#allocation3], %s914
        %p916 = pneg %p88
        %p917 = pneg %p85
        %p918 = pneg %p114
        %p919 = pneg %p111
        %s920 = smul.u32 2, %s17
        %p921 = scmp.lt.s32.totalorder %s920, 3
        %s922 = scalar_select %p921, %s920, 3
        %s923 = smul.addr %s922, 32
        %s924 = smul.addr %s923, 8
        %s925 = scalar_lea.vmem %s2, %s924
        %s926 = smul.u32 %s17, 2
        %s927 = sadd.s32 %s926, %s18
        %p928 = scmp.lt.s32.totalorder %s927, 3
        %s929 = scalar_select %p928, %s927, 3
        %s930 = smul.u32 32, %s929
        %s931 = ssub.s32 125, %s930
        %p932 = scmp.lt.s32.totalorder %s931, 32
        %s933 = scalar_select %p932, %s931, 32
        %s934 = smul.u32 256, %s933
        %s935 = smul.u32 %s17, 2
        %s936 = sadd.s32 %s935, %s18
        %p937 = scmp.lt.s32.totalorder %s936, 3
        %s938 = scalar_select %p937, %s936, 3
        %s939 = smul.u32 32, %s938
        %s940 = ssub.s32 125, %s939
        %p941 = scmp.lt.s32.totalorder %s940, 32
        %s942 = scalar_select %p941, %s940, 32
        %s943 = smul.u32 256, %s942
        %s944 = smul.u32 2, %s17
        %p945 = scmp.lt.s32.totalorder %s944, 3
        %s946 = scalar_select %p945, %s944, 3
        %s947 = smul.addr %s946, 32
        %s948 = smul.addr %s947, 8
        %s949 = scalar_lea.vmem %s2, %s948
        %s950 = smul.u32 2, %s17
        %p951 = scmp.eq.s32.totalorder %s18, 0
        // Predicated region
        $region133: #{tpu_custom_call.1} parent=123 // pred_check
          %p952 = pneg %p951
        $region134: #{tpu_custom_call.1} parent=123 // pred_check_branch
          %954 = sbr.rel (%p952) target = $region136
        $region135: #{tpu_custom_call.1} parent=123 // pred_region
          %vm955 = vcmask 64512
          %956 = vst.msk [vmem:[%s949] sm:$0xff] %vm955, 0.0
          %957 = vst.msk [vmem:[%s949 + $0x8] sm:$0xff] %vm955, 0.0
          %958 = vst.msk [vmem:[%s949 + $0x10] sm:$0xff] %vm955, 0.0
          %959 = vst.msk [vmem:[%s949 + $0x18] sm:$0xff] %vm955, 0.0
          %960 = vst.msk [vmem:[%s949 + $0x20] sm:$0xff] %vm955, 0.0
          %961 = vst.msk [vmem:[%s949 + $0x28] sm:$0xff] %vm955, 0.0
          %962 = vst.msk [vmem:[%s949 + $0x30] sm:$0xff] %vm955, 0.0
          %963 = vst.msk [vmem:[%s949 + $0x38] sm:$0xff] %vm955, 0.0
          %964 = vst.msk [vmem:[%s949 + $0x40] sm:$0xff] %vm955, 0.0
          %965 = vst.msk [vmem:[%s949 + $0x48] sm:$0xff] %vm955, 0.0
          %966 = vst.msk [vmem:[%s949 + $0x50] sm:$0xff] %vm955, 0.0
          %967 = vst.msk [vmem:[%s949 + $0x58] sm:$0xff] %vm955, 0.0
          %968 = vst.msk [vmem:[%s949 + $0x60] sm:$0xff] %vm955, 0.0
          %969 = vst.msk [vmem:[%s949 + $0x68] sm:$0xff] %vm955, 0.0
          %970 = vst.msk [vmem:[%s949 + $0x70] sm:$0xff] %vm955, 0.0
          %971 = vst.msk [vmem:[%s949 + $0x78] sm:$0xff] %vm955, 0.0
          %972 = vst.msk [vmem:[%s949 + $0x80] sm:$0xff] %vm955, 0.0
          %973 = vst.msk [vmem:[%s949 + $0x88] sm:$0xff] %vm955, 0.0
          %974 = vst.msk [vmem:[%s949 + $0x90] sm:$0xff] %vm955, 0.0
          %975 = vst.msk [vmem:[%s949 + $0x98] sm:$0xff] %vm955, 0.0
          %976 = vst.msk [vmem:[%s949 + $0xa0] sm:$0xff] %vm955, 0.0
          %977 = vst.msk [vmem:[%s949 + $0xa8] sm:$0xff] %vm955, 0.0
          %978 = vst.msk [vmem:[%s949 + $0xb0] sm:$0xff] %vm955, 0.0
          %979 = vst.msk [vmem:[%s949 + $0xb8] sm:$0xff] %vm955, 0.0
          %980 = vst.msk [vmem:[%s949 + $0xc0] sm:$0xff] %vm955, 0.0
          %981 = vst.msk [vmem:[%s949 + $0xc8] sm:$0xff] %vm955, 0.0
          %982 = vst.msk [vmem:[%s949 + $0xd0] sm:$0xff] %vm955, 0.0
          %983 = vst.msk [vmem:[%s949 + $0xd8] sm:$0xff] %vm955, 0.0
          %984 = vst.msk [vmem:[%s949 + $0xe0] sm:$0xff] %vm955, 0.0
          %985 = vst.msk [vmem:[%s949 + $0xe8] sm:$0xff] %vm955, 0.0
          %986 = vst.msk [vmem:[%s949 + $0xf0] sm:$0xff] %vm955, 0.0
          %987 = vst.msk [vmem:[%s949 + $0xf8] sm:$0xff] %vm955, 0.0
          %988 = vst.msk [vmem:[%s949 + $0x100] sm:$0xff] %vm955, 0.0
          %989 = vst.msk [vmem:[%s949 + $0x108] sm:$0xff] %vm955, 0.0
          %990 = vst.msk [vmem:[%s949 + $0x110] sm:$0xff] %vm955, 0.0
          %991 = vst.msk [vmem:[%s949 + $0x118] sm:$0xff] %vm955, 0.0
          %992 = vst.msk [vmem:[%s949 + $0x120] sm:$0xff] %vm955, 0.0
          %993 = vst.msk [vmem:[%s949 + $0x128] sm:$0xff] %vm955, 0.0
          %994 = vst.msk [vmem:[%s949 + $0x130] sm:$0xff] %vm955, 0.0
          %995 = vst.msk [vmem:[%s949 + $0x138] sm:$0xff] %vm955, 0.0
          %996 = vst.msk [vmem:[%s949 + $0x140] sm:$0xff] %vm955, 0.0
          %997 = vst.msk [vmem:[%s949 + $0x148] sm:$0xff] %vm955, 0.0
          %998 = vst.msk [vmem:[%s949 + $0x150] sm:$0xff] %vm955, 0.0
          %999 = vst.msk [vmem:[%s949 + $0x158] sm:$0xff] %vm955, 0.0
          %1000 = vst.msk [vmem:[%s949 + $0x160] sm:$0xff] %vm955, 0.0
          %1001 = vst.msk [vmem:[%s949 + $0x168] sm:$0xff] %vm955, 0.0
          %1002 = vst.msk [vmem:[%s949 + $0x170] sm:$0xff] %vm955, 0.0
          %1003 = vst.msk [vmem:[%s949 + $0x178] sm:$0xff] %vm955, 0.0
          %1004 = vst.msk [vmem:[%s949 + $0x180] sm:$0xff] %vm955, 0.0
          %1005 = vst.msk [vmem:[%s949 + $0x188] sm:$0xff] %vm955, 0.0
          %1006 = vst.msk [vmem:[%s949 + $0x190] sm:$0xff] %vm955, 0.0
          %1007 = vst.msk [vmem:[%s949 + $0x198] sm:$0xff] %vm955, 0.0
          %1008 = vst.msk [vmem:[%s949 + $0x1a0] sm:$0xff] %vm955, 0.0
          %1009 = vst.msk [vmem:[%s949 + $0x1a8] sm:$0xff] %vm955, 0.0
          %1010 = vst.msk [vmem:[%s949 + $0x1b0] sm:$0xff] %vm955, 0.0
          %1011 = vst.msk [vmem:[%s949 + $0x1b8] sm:$0xff] %vm955, 0.0
          %1012 = vst.msk [vmem:[%s949 + $0x1c0] sm:$0xff] %vm955, 0.0
          %1013 = vst.msk [vmem:[%s949 + $0x1c8] sm:$0xff] %vm955, 0.0
          %1014 = vst.msk [vmem:[%s949 + $0x1d0] sm:$0xff] %vm955, 0.0
          %1015 = vst.msk [vmem:[%s949 + $0x1d8] sm:$0xff] %vm955, 0.0
          %1016 = vst.msk [vmem:[%s949 + $0x1e0] sm:$0xff] %vm955, 0.0
          %1017 = vst.msk [vmem:[%s949 + $0x1e8] sm:$0xff] %vm955, 0.0
          %1018 = vst.msk [vmem:[%s949 + $0x1f0] sm:$0xff] %vm955, 0.0
          %1019 = vst.msk [vmem:[%s949 + $0x1f8] sm:$0xff] %vm955, 0.0
        $region136: #{tpu_custom_call.1} parent=123 // pred_fallthru
          _
        %v1020 = vld [vmem:[%s895] sm:$0xff]
        %v1021 = vld [vmem:[%s895 + $0x8] sm:$0xff]
        %v1022 = vld [vmem:[%s895 + $0x10] sm:$0xff]
        %v1023 = vld [vmem:[%s895 + $0x18] sm:$0xff]
        %v1024 = vld [vmem:[%s895 + $0x20] sm:$0xff]
        %v1025 = vld [vmem:[%s895 + $0x28] sm:$0xff]
        %v1026 = vld [vmem:[%s895 + $0x30] sm:$0xff]
        %v1027 = vld [vmem:[%s895 + $0x38] sm:$0xff]
        %v1028 = vld [vmem:[%s895 + $0x40] sm:$0xff]
        %v1029 = vld [vmem:[%s895 + $0x48] sm:$0xff]
        %v1030 = vld [vmem:[%s895 + $0x50] sm:$0xff]
        %v1031 = vld [vmem:[%s895 + $0x58] sm:$0xff]
        %v1032 = vld [vmem:[%s895 + $0x60] sm:$0xff]
        %v1033 = vld [vmem:[%s895 + $0x68] sm:$0xff]
        %v1034 = vld [vmem:[%s895 + $0x70] sm:$0xff]
        %v1035 = vld [vmem:[%s895 + $0x78] sm:$0xff]
        %v1036 = vld [vmem:[%s895 + $0x80] sm:$0xff]
        %v1037 = vld [vmem:[%s895 + $0x88] sm:$0xff]
        %v1038 = vld [vmem:[%s895 + $0x90] sm:$0xff]
        %v1039 = vld [vmem:[%s895 + $0x98] sm:$0xff]
        %v1040 = vld [vmem:[%s895 + $0xa0] sm:$0xff]
        %v1041 = vld [vmem:[%s895 + $0xa8] sm:$0xff]
        %v1042 = vld [vmem:[%s895 + $0xb0] sm:$0xff]
        %v1043 = vld [vmem:[%s895 + $0xb8] sm:$0xff]
        %v1044 = vld [vmem:[%s895 + $0xc0] sm:$0xff]
        %v1045 = vld [vmem:[%s895 + $0xc8] sm:$0xff]
        %v1046 = vld [vmem:[%s895 + $0xd0] sm:$0xff]
        %v1047 = vld [vmem:[%s895 + $0xd8] sm:$0xff]
        %v1048 = vld [vmem:[%s895 + $0xe0] sm:$0xff]
        %v1049 = vld [vmem:[%s895 + $0xe8] sm:$0xff]
        %v1050 = vld [vmem:[%s895 + $0xf0] sm:$0xff]
        %v1051 = vld [vmem:[%s895 + $0xf8] sm:$0xff]
        %v1052 = vld [vmem:[%s895 + $0x100] sm:$0xff]
        %v1053 = vld [vmem:[%s895 + $0x108] sm:$0xff]
        %v1054 = vld [vmem:[%s895 + $0x110] sm:$0xff]
        %v1055 = vld [vmem:[%s895 + $0x118] sm:$0xff]
        %v1056 = vld [vmem:[%s895 + $0x120] sm:$0xff]
        %v1057 = vld [vmem:[%s895 + $0x128] sm:$0xff]
        %v1058 = vld [vmem:[%s895 + $0x130] sm:$0xff]
        %v1059 = vld [vmem:[%s895 + $0x138] sm:$0xff]
        %v1060 = vld [vmem:[%s895 + $0x140] sm:$0xff]
        %v1061 = vld [vmem:[%s895 + $0x148] sm:$0xff]
        %v1062 = vld [vmem:[%s895 + $0x150] sm:$0xff]
        %v1063 = vld [vmem:[%s895 + $0x158] sm:$0xff]
        %v1064 = vld [vmem:[%s895 + $0x160] sm:$0xff]
        %v1065 = vld [vmem:[%s895 + $0x168] sm:$0xff]
        %v1066 = vld [vmem:[%s895 + $0x170] sm:$0xff]
        %v1067 = vld [vmem:[%s895 + $0x178] sm:$0xff]
        %v1068 = vld [vmem:[%s895 + $0x180] sm:$0xff]
        %v1069 = vld [vmem:[%s895 + $0x188] sm:$0xff]
        %v1070 = vld [vmem:[%s895 + $0x190] sm:$0xff]
        %v1071 = vld [vmem:[%s895 + $0x198] sm:$0xff]
        %v1072 = vld [vmem:[%s895 + $0x1a0] sm:$0xff]
        %v1073 = vld [vmem:[%s895 + $0x1a8] sm:$0xff]
        %v1074 = vld [vmem:[%s895 + $0x1b0] sm:$0xff]
        %v1075 = vld [vmem:[%s895 + $0x1b8] sm:$0xff]
        %v1076 = vld [vmem:[%s895 + $0x1c0] sm:$0xff]
        %v1077 = vld [vmem:[%s895 + $0x1c8] sm:$0xff]
        %v1078 = vld [vmem:[%s895 + $0x1d0] sm:$0xff]
        %v1079 = vld [vmem:[%s895 + $0x1d8] sm:$0xff]
        %v1080 = vld [vmem:[%s895 + $0x1e0] sm:$0xff]
        %v1081 = vld [vmem:[%s895 + $0x1e8] sm:$0xff]
        %v1082 = vld [vmem:[%s895 + $0x1f0] sm:$0xff]
        %v1083 = vld [vmem:[%s895 + $0x1f8] sm:$0xff]
        %v1084 = vld [vmem:[%s902] sm:$0xff]
        %v1085 = vld [vmem:[%s902 + $0x8] sm:$0xff]
        %v1086 = vld [vmem:[%s902 + $0x10] sm:$0xff]
        %v1087 = vld [vmem:[%s902 + $0x18] sm:$0xff]
        %v1088 = vld [vmem:[%s902 + $0x20] sm:$0xff]
        %v1089 = vld [vmem:[%s902 + $0x28] sm:$0xff]
        %v1090 = vld [vmem:[%s902 + $0x30] sm:$0xff]
        %v1091 = vld [vmem:[%s902 + $0x38] sm:$0xff]
        %v1092 = vld [vmem:[%s902 + $0x40] sm:$0xff]
        %v1093 = vld [vmem:[%s902 + $0x48] sm:$0xff]
        %v1094 = vld [vmem:[%s902 + $0x50] sm:$0xff]
        %v1095 = vld [vmem:[%s902 + $0x58] sm:$0xff]
        %v1096 = vld [vmem:[%s902 + $0x60] sm:$0xff]
        %v1097 = vld [vmem:[%s902 + $0x68] sm:$0xff]
        %v1098 = vld [vmem:[%s902 + $0x70] sm:$0xff]
        %v1099 = vld [vmem:[%s902 + $0x78] sm:$0xff]
        %v1100 = vld [vmem:[%s902 + $0x80] sm:$0xff]
        %v1101 = vld [vmem:[%s902 + $0x88] sm:$0xff]
        %v1102 = vld [vmem:[%s902 + $0x90] sm:$0xff]
        %v1103 = vld [vmem:[%s902 + $0x98] sm:$0xff]
        %v1104 = vld [vmem:[%s902 + $0xa0] sm:$0xff]
        %v1105 = vld [vmem:[%s902 + $0xa8] sm:$0xff]
        %v1106 = vld [vmem:[%s902 + $0xb0] sm:$0xff]
        %v1107 = vld [vmem:[%s902 + $0xb8] sm:$0xff]
        %v1108 = vld [vmem:[%s902 + $0xc0] sm:$0xff]
        %v1109 = vld [vmem:[%s902 + $0xc8] sm:$0xff]
        %v1110 = vld [vmem:[%s902 + $0xd0] sm:$0xff]
        %v1111 = vld [vmem:[%s902 + $0xd8] sm:$0xff]
        %v1112 = vld [vmem:[%s902 + $0xe0] sm:$0xff]
        %v1113 = vld [vmem:[%s902 + $0xe8] sm:$0xff]
        %v1114 = vld [vmem:[%s902 + $0xf0] sm:$0xff]
        %v1115 = vld [vmem:[%s902 + $0xf8] sm:$0xff]
        %v1116 = vld [vmem:[%s902 + $0x100] sm:$0xff]
        %v1117 = vld [vmem:[%s902 + $0x108] sm:$0xff]
        %v1118 = vld [vmem:[%s902 + $0x110] sm:$0xff]
        %v1119 = vld [vmem:[%s902 + $0x118] sm:$0xff]
        %v1120 = vld [vmem:[%s902 + $0x120] sm:$0xff]
        %v1121 = vld [vmem:[%s902 + $0x128] sm:$0xff]
        %v1122 = vld [vmem:[%s902 + $0x130] sm:$0xff]
        %v1123 = vld [vmem:[%s902 + $0x138] sm:$0xff]
        %v1124 = vld [vmem:[%s902 + $0x140] sm:$0xff]
        %v1125 = vld [vmem:[%s902 + $0x148] sm:$0xff]
        %v1126 = vld [vmem:[%s902 + $0x150] sm:$0xff]
        %v1127 = vld [vmem:[%s902 + $0x158] sm:$0xff]
        %v1128 = vld [vmem:[%s902 + $0x160] sm:$0xff]
        %v1129 = vld [vmem:[%s902 + $0x168] sm:$0xff]
        %v1130 = vld [vmem:[%s902 + $0x170] sm:$0xff]
        %v1131 = vld [vmem:[%s902 + $0x178] sm:$0xff]
        %v1132 = vld [vmem:[%s902 + $0x180] sm:$0xff]
        %v1133 = vld [vmem:[%s902 + $0x188] sm:$0xff]
        %v1134 = vld [vmem:[%s902 + $0x190] sm:$0xff]
        %v1135 = vld [vmem:[%s902 + $0x198] sm:$0xff]
        %v1136 = vld [vmem:[%s902 + $0x1a0] sm:$0xff]
        %v1137 = vld [vmem:[%s902 + $0x1a8] sm:$0xff]
        %v1138 = vld [vmem:[%s902 + $0x1b0] sm:$0xff]
        %v1139 = vld [vmem:[%s902 + $0x1b8] sm:$0xff]
        %v1140 = vld [vmem:[%s902 + $0x1c0] sm:$0xff]
        %v1141 = vld [vmem:[%s902 + $0x1c8] sm:$0xff]
        %v1142 = vld [vmem:[%s902 + $0x1d0] sm:$0xff]
        %v1143 = vld [vmem:[%s902 + $0x1d8] sm:$0xff]
        %v1144 = vld [vmem:[%s902 + $0x1e0] sm:$0xff]
        %v1145 = vld [vmem:[%s902 + $0x1e8] sm:$0xff]
        %v1146 = vld [vmem:[%s902 + $0x1f0] sm:$0xff]
        %v1147 = vld [vmem:[%s902 + $0x1f8] sm:$0xff]
        %v1148 = vcvt.f32.s32.to.zero.pseudo %v1084
        %v1149 = vcvt.f32.s32.to.zero.pseudo %v1085
        %v1150 = vcvt.f32.s32.to.zero.pseudo %v1086
        %v1151 = vcvt.f32.s32.to.zero.pseudo %v1087
        %v1152 = vcvt.f32.s32.to.zero.pseudo %v1088
        %v1153 = vcvt.f32.s32.to.zero.pseudo %v1089
        %v1154 = vcvt.f32.s32.to.zero.pseudo %v1090
        %v1155 = vcvt.f32.s32.to.zero.pseudo %v1091
        %v1156 = vcvt.f32.s32.to.zero.pseudo %v1092
        %v1157 = vcvt.f32.s32.to.zero.pseudo %v1093
        %v1158 = vcvt.f32.s32.to.zero.pseudo %v1094
        %v1159 = vcvt.f32.s32.to.zero.pseudo %v1095
        %v1160 = vcvt.f32.s32.to.zero.pseudo %v1096
        %v1161 = vcvt.f32.s32.to.zero.pseudo %v1097
        %v1162 = vcvt.f32.s32.to.zero.pseudo %v1098
        %v1163 = vcvt.f32.s32.to.zero.pseudo %v1099
        %v1164 = vcvt.f32.s32.to.zero.pseudo %v1100
        %v1165 = vcvt.f32.s32.to.zero.pseudo %v1101
        %v1166 = vcvt.f32.s32.to.zero.pseudo %v1102
        %v1167 = vcvt.f32.s32.to.zero.pseudo %v1103
        %v1168 = vcvt.f32.s32.to.zero.pseudo %v1104
        %v1169 = vcvt.f32.s32.to.zero.pseudo %v1105
        %v1170 = vcvt.f32.s32.to.zero.pseudo %v1106
        %v1171 = vcvt.f32.s32.to.zero.pseudo %v1107
        %v1172 = vcvt.f32.s32.to.zero.pseudo %v1108
        %v1173 = vcvt.f32.s32.to.zero.pseudo %v1109
        %v1174 = vcvt.f32.s32.to.zero.pseudo %v1110
        %v1175 = vcvt.f32.s32.to.zero.pseudo %v1111
        %v1176 = vcvt.f32.s32.to.zero.pseudo %v1112
        %v1177 = vcvt.f32.s32.to.zero.pseudo %v1113
        %v1178 = vcvt.f32.s32.to.zero.pseudo %v1114
        %v1179 = vcvt.f32.s32.to.zero.pseudo %v1115
        %v1180 = vcvt.f32.s32.to.zero.pseudo %v1116
        %v1181 = vcvt.f32.s32.to.zero.pseudo %v1117
        %v1182 = vcvt.f32.s32.to.zero.pseudo %v1118
        %v1183 = vcvt.f32.s32.to.zero.pseudo %v1119
        %v1184 = vcvt.f32.s32.to.zero.pseudo %v1120
        %v1185 = vcvt.f32.s32.to.zero.pseudo %v1121
        %v1186 = vcvt.f32.s32.to.zero.pseudo %v1122
        %v1187 = vcvt.f32.s32.to.zero.pseudo %v1123
        %v1188 = vcvt.f32.s32.to.zero.pseudo %v1124
        %v1189 = vcvt.f32.s32.to.zero.pseudo %v1125
        %v1190 = vcvt.f32.s32.to.zero.pseudo %v1126
        %v1191 = vcvt.f32.s32.to.zero.pseudo %v1127
        %v1192 = vcvt.f32.s32.to.zero.pseudo %v1128
        %v1193 = vcvt.f32.s32.to.zero.pseudo %v1129
        %v1194 = vcvt.f32.s32.to.zero.pseudo %v1130
        %v1195 = vcvt.f32.s32.to.zero.pseudo %v1131
        %v1196 = vcvt.f32.s32.to.zero.pseudo %v1132
        %v1197 = vcvt.f32.s32.to.zero.pseudo %v1133
        %v1198 = vcvt.f32.s32.to.zero.pseudo %v1134
        %v1199 = vcvt.f32.s32.to.zero.pseudo %v1135
        %v1200 = vcvt.f32.s32.to.zero.pseudo %v1136
        %v1201 = vcvt.f32.s32.to.zero.pseudo %v1137
        %v1202 = vcvt.f32.s32.to.zero.pseudo %v1138
        %v1203 = vcvt.f32.s32.to.zero.pseudo %v1139
        %v1204 = vcvt.f32.s32.to.zero.pseudo %v1140
        %v1205 = vcvt.f32.s32.to.zero.pseudo %v1141
        %v1206 = vcvt.f32.s32.to.zero.pseudo %v1142
        %v1207 = vcvt.f32.s32.to.zero.pseudo %v1143
        %v1208 = vcvt.f32.s32.to.zero.pseudo %v1144
        %v1209 = vcvt.f32.s32.to.zero.pseudo %v1145
        %v1210 = vcvt.f32.s32.to.zero.pseudo %v1146
        %v1211 = vcvt.f32.s32.to.zero.pseudo %v1147
        %v1212 = vlaneseq
        %v1213 = vand.u32 %v1212, 127
        %1214 = vset.pattern.permute.xlu0 0
        %1215 = vperm.xlu0 %1214, %v1148
        %v1216 = vpop.permute.xlu0 %1215
        %1217 = vset.pattern.permute.xlu0 0
        %1218 = vperm.xlu0 %1217, %v1149
        %v1219 = vpop.permute.xlu0 %1218
        %1220 = vset.pattern.permute.xlu0 0
        %1221 = vperm.xlu0 %1220, %v1150
        %v1222 = vpop.permute.xlu0 %1221
        %1223 = vset.pattern.permute.xlu0 0
        %1224 = vperm.xlu0 %1223, %v1151
        %v1225 = vpop.permute.xlu0 %1224
        %1226 = vset.pattern.permute.xlu0 0
        %1227 = vperm.xlu0 %1226, %v1152
        %v1228 = vpop.permute.xlu0 %1227
        %1229 = vset.pattern.permute.xlu0 0
        %1230 = vperm.xlu0 %1229, %v1153
        %v1231 = vpop.permute.xlu0 %1230
        %1232 = vset.pattern.permute.xlu0 0
        %1233 = vperm.xlu0 %1232, %v1154
        %v1234 = vpop.permute.xlu0 %1233
        %1235 = vset.pattern.permute.xlu0 0
        %1236 = vperm.xlu0 %1235, %v1155
        %v1237 = vpop.permute.xlu0 %1236
        %1238 = vset.pattern.permute.xlu0 0
        %1239 = vperm.xlu0 %1238, %v1156
        %v1240 = vpop.permute.xlu0 %1239
        %1241 = vset.pattern.permute.xlu0 0
        %1242 = vperm.xlu0 %1241, %v1157
        %v1243 = vpop.permute.xlu0 %1242
        %1244 = vset.pattern.permute.xlu0 0
        %1245 = vperm.xlu0 %1244, %v1158
        %v1246 = vpop.permute.xlu0 %1245
        %1247 = vset.pattern.permute.xlu0 0
        %1248 = vperm.xlu0 %1247, %v1159
        %v1249 = vpop.permute.xlu0 %1248
        %1250 = vset.pattern.permute.xlu0 0
        %1251 = vperm.xlu0 %1250, %v1160
        %v1252 = vpop.permute.xlu0 %1251
        %1253 = vset.pattern.permute.xlu0 0
        %1254 = vperm.xlu0 %1253, %v1161
        %v1255 = vpop.permute.xlu0 %1254
        %1256 = vset.pattern.permute.xlu0 0
        %1257 = vperm.xlu0 %1256, %v1162
        %v1258 = vpop.permute.xlu0 %1257
        %1259 = vset.pattern.permute.xlu0 0
        %1260 = vperm.xlu0 %1259, %v1163
        %v1261 = vpop.permute.xlu0 %1260
        %1262 = vset.pattern.permute.xlu0 0
        %1263 = vperm.xlu0 %1262, %v1164
        %v1264 = vpop.permute.xlu0 %1263
        %1265 = vset.pattern.permute.xlu0 0
        %1266 = vperm.xlu0 %1265, %v1165
        %v1267 = vpop.permute.xlu0 %1266
        %1268 = vset.pattern.permute.xlu0 0
        %1269 = vperm.xlu0 %1268, %v1166
        %v1270 = vpop.permute.xlu0 %1269
        %1271 = vset.pattern.permute.xlu0 0
        %1272 = vperm.xlu0 %1271, %v1167
        %v1273 = vpop.permute.xlu0 %1272
        %1274 = vset.pattern.permute.xlu0 0
        %1275 = vperm.xlu0 %1274, %v1168
        %v1276 = vpop.permute.xlu0 %1275
        %1277 = vset.pattern.permute.xlu0 0
        %1278 = vperm.xlu0 %1277, %v1169
        %v1279 = vpop.permute.xlu0 %1278
        %1280 = vset.pattern.permute.xlu0 0
        %1281 = vperm.xlu0 %1280, %v1170
        %v1282 = vpop.permute.xlu0 %1281
        %1283 = vset.pattern.permute.xlu0 0
        %1284 = vperm.xlu0 %1283, %v1171
        %v1285 = vpop.permute.xlu0 %1284
        %1286 = vset.pattern.permute.xlu0 0
        %1287 = vperm.xlu0 %1286, %v1172
        %v1288 = vpop.permute.xlu0 %1287
        %1289 = vset.pattern.permute.xlu0 0
        %1290 = vperm.xlu0 %1289, %v1173
        %v1291 = vpop.permute.xlu0 %1290
        %1292 = vset.pattern.permute.xlu0 0
        %1293 = vperm.xlu0 %1292, %v1174
        %v1294 = vpop.permute.xlu0 %1293
        %1295 = vset.pattern.permute.xlu0 0
        %1296 = vperm.xlu0 %1295, %v1175
        %v1297 = vpop.permute.xlu0 %1296
        %1298 = vset.pattern.permute.xlu0 0
        %1299 = vperm.xlu0 %1298, %v1176
        %v1300 = vpop.permute.xlu0 %1299
        %1301 = vset.pattern.permute.xlu0 0
        %1302 = vperm.xlu0 %1301, %v1177
        %v1303 = vpop.permute.xlu0 %1302
        %1304 = vset.pattern.permute.xlu0 0
        %1305 = vperm.xlu0 %1304, %v1178
        %v1306 = vpop.permute.xlu0 %1305
        %1307 = vset.pattern.permute.xlu0 0
        %1308 = vperm.xlu0 %1307, %v1179
        %v1309 = vpop.permute.xlu0 %1308
        %1310 = vset.pattern.permute.xlu0 0
        %1311 = vperm.xlu0 %1310, %v1180
        %v1312 = vpop.permute.xlu0 %1311
        %1313 = vset.pattern.permute.xlu0 0
        %1314 = vperm.xlu0 %1313, %v1181
        %v1315 = vpop.permute.xlu0 %1314
        %1316 = vset.pattern.permute.xlu0 0
        %1317 = vperm.xlu0 %1316, %v1182
        %v1318 = vpop.permute.xlu0 %1317
        %1319 = vset.pattern.permute.xlu0 0
        %1320 = vperm.xlu0 %1319, %v1183
        %v1321 = vpop.permute.xlu0 %1320
        %1322 = vset.pattern.permute.xlu0 0
        %1323 = vperm.xlu0 %1322, %v1184
        %v1324 = vpop.permute.xlu0 %1323
        %1325 = vset.pattern.permute.xlu0 0
        %1326 = vperm.xlu0 %1325, %v1185
        %v1327 = vpop.permute.xlu0 %1326
        %1328 = vset.pattern.permute.xlu0 0
        %1329 = vperm.xlu0 %1328, %v1186
        %v1330 = vpop.permute.xlu0 %1329
        %1331 = vset.pattern.permute.xlu0 0
        %1332 = vperm.xlu0 %1331, %v1187
        %v1333 = vpop.permute.xlu0 %1332
        %1334 = vset.pattern.permute.xlu0 0
        %1335 = vperm.xlu0 %1334, %v1188
        %v1336 = vpop.permute.xlu0 %1335
        %1337 = vset.pattern.permute.xlu0 0
        %1338 = vperm.xlu0 %1337, %v1189
        %v1339 = vpop.permute.xlu0 %1338
        %1340 = vset.pattern.permute.xlu0 0
        %1341 = vperm.xlu0 %1340, %v1190
        %v1342 = vpop.permute.xlu0 %1341
        %1343 = vset.pattern.permute.xlu0 0
        %1344 = vperm.xlu0 %1343, %v1191
        %v1345 = vpop.permute.xlu0 %1344
        %1346 = vset.pattern.permute.xlu0 0
        %1347 = vperm.xlu0 %1346, %v1192
        %v1348 = vpop.permute.xlu0 %1347
        %1349 = vset.pattern.permute.xlu0 0
        %1350 = vperm.xlu0 %1349, %v1193
        %v1351 = vpop.permute.xlu0 %1350
        %1352 = vset.pattern.permute.xlu0 0
        %1353 = vperm.xlu0 %1352, %v1194
        %v1354 = vpop.permute.xlu0 %1353
        %1355 = vset.pattern.permute.xlu0 0
        %1356 = vperm.xlu0 %1355, %v1195
        %v1357 = vpop.permute.xlu0 %1356
        %1358 = vset.pattern.permute.xlu0 0
        %1359 = vperm.xlu0 %1358, %v1196
        %v1360 = vpop.permute.xlu0 %1359
        %1361 = vset.pattern.permute.xlu0 0
        %1362 = vperm.xlu0 %1361, %v1197
        %v1363 = vpop.permute.xlu0 %1362
        %1364 = vset.pattern.permute.xlu0 0
        %1365 = vperm.xlu0 %1364, %v1198
        %v1366 = vpop.permute.xlu0 %1365
        %1367 = vset.pattern.permute.xlu0 0
        %1368 = vperm.xlu0 %1367, %v1199
        %v1369 = vpop.permute.xlu0 %1368
        %1370 = vset.pattern.permute.xlu0 0
        %1371 = vperm.xlu0 %1370, %v1200
        %v1372 = vpop.permute.xlu0 %1371
        %1373 = vset.pattern.permute.xlu0 0
        %1374 = vperm.xlu0 %1373, %v1201
        %v1375 = vpop.permute.xlu0 %1374
        %1376 = vset.pattern.permute.xlu0 0
        %1377 = vperm.xlu0 %1376, %v1202
        %v1378 = vpop.permute.xlu0 %1377
        %1379 = vset.pattern.permute.xlu0 0
        %1380 = vperm.xlu0 %1379, %v1203
        %v1381 = vpop.permute.xlu0 %1380
        %1382 = vset.pattern.permute.xlu0 0
        %1383 = vperm.xlu0 %1382, %v1204
        %v1384 = vpop.permute.xlu0 %1383
        %1385 = vset.pattern.permute.xlu0 0
        %1386 = vperm.xlu0 %1385, %v1205
        %v1387 = vpop.permute.xlu0 %1386
        %1388 = vset.pattern.permute.xlu0 0
        %1389 = vperm.xlu0 %1388, %v1206
        %v1390 = vpop.permute.xlu0 %1389
        %1391 = vset.pattern.permute.xlu0 0
        %1392 = vperm.xlu0 %1391, %v1207
        %v1393 = vpop.permute.xlu0 %1392
        %1394 = vset.pattern.permute.xlu0 0
        %1395 = vperm.xlu0 %1394, %v1208
        %v1396 = vpop.permute.xlu0 %1395
        %1397 = vset.pattern.permute.xlu0 0
        %1398 = vperm.xlu0 %1397, %v1209
        %v1399 = vpop.permute.xlu0 %1398
        %1400 = vset.pattern.permute.xlu0 0
        %1401 = vperm.xlu0 %1400, %v1210
        %v1402 = vpop.permute.xlu0 %1401
        %1403 = vset.pattern.permute.xlu0 0
        %1404 = vperm.xlu0 %1403, %v1211
        %v1405 = vpop.permute.xlu0 %1404
        %vm1406 = vcmp.le.s32.totalorder %v1213, %v1216
        %vm1407 = vcmp.le.s32.totalorder %v1213, %v1219
        %vm1408 = vcmp.le.s32.totalorder %v1213, %v1222
        %vm1409 = vcmp.le.s32.totalorder %v1213, %v1225
        %vm1410 = vcmp.le.s32.totalorder %v1213, %v1228
        %vm1411 = vcmp.le.s32.totalorder %v1213, %v1231
        %vm1412 = vcmp.le.s32.totalorder %v1213, %v1234
        %vm1413 = vcmp.le.s32.totalorder %v1213, %v1237
        %vm1414 = vcmp.le.s32.totalorder %v1213, %v1240
        %vm1415 = vcmp.le.s32.totalorder %v1213, %v1243
        %vm1416 = vcmp.le.s32.totalorder %v1213, %v1246
        %vm1417 = vcmp.le.s32.totalorder %v1213, %v1249
        %vm1418 = vcmp.le.s32.totalorder %v1213, %v1252
        %vm1419 = vcmp.le.s32.totalorder %v1213, %v1255
        %vm1420 = vcmp.le.s32.totalorder %v1213, %v1258
        %vm1421 = vcmp.le.s32.totalorder %v1213, %v1261
        %vm1422 = vcmp.le.s32.totalorder %v1213, %v1264
        %vm1423 = vcmp.le.s32.totalorder %v1213, %v1267
        %vm1424 = vcmp.le.s32.totalorder %v1213, %v1270
        %vm1425 = vcmp.le.s32.totalorder %v1213, %v1273
        %vm1426 = vcmp.le.s32.totalorder %v1213, %v1276
        %vm1427 = vcmp.le.s32.totalorder %v1213, %v1279
        %vm1428 = vcmp.le.s32.totalorder %v1213, %v1282
        %vm1429 = vcmp.le.s32.totalorder %v1213, %v1285
        %vm1430 = vcmp.le.s32.totalorder %v1213, %v1288
        %vm1431 = vcmp.le.s32.totalorder %v1213, %v1291
        %vm1432 = vcmp.le.s32.totalorder %v1213, %v1294
        %vm1433 = vcmp.le.s32.totalorder %v1213, %v1297
        %vm1434 = vcmp.le.s32.totalorder %v1213, %v1300
        %vm1435 = vcmp.le.s32.totalorder %v1213, %v1303
        %vm1436 = vcmp.le.s32.totalorder %v1213, %v1306
        %vm1437 = vcmp.le.s32.totalorder %v1213, %v1309
        %vm1438 = vcmp.le.s32.totalorder %v1213, %v1312
        %vm1439 = vcmp.le.s32.totalorder %v1213, %v1315
        %vm1440 = vcmp.le.s32.totalorder %v1213, %v1318
        %vm1441 = vcmp.le.s32.totalorder %v1213, %v1321
        %vm1442 = vcmp.le.s32.totalorder %v1213, %v1324
        %vm1443 = vcmp.le.s32.totalorder %v1213, %v1327
        %vm1444 = vcmp.le.s32.totalorder %v1213, %v1330
        %vm1445 = vcmp.le.s32.totalorder %v1213, %v1333
        %vm1446 = vcmp.le.s32.totalorder %v1213, %v1336
        %vm1447 = vcmp.le.s32.totalorder %v1213, %v1339
        %vm1448 = vcmp.le.s32.totalorder %v1213, %v1342
        %vm1449 = vcmp.le.s32.totalorder %v1213, %v1345
        %vm1450 = vcmp.le.s32.totalorder %v1213, %v1348
        %vm1451 = vcmp.le.s32.totalorder %v1213, %v1351
        %vm1452 = vcmp.le.s32.totalorder %v1213, %v1354
        %vm1453 = vcmp.le.s32.totalorder %v1213, %v1357
        %vm1454 = vcmp.le.s32.totalorder %v1213, %v1360
        %vm1455 = vcmp.le.s32.totalorder %v1213, %v1363
        %vm1456 = vcmp.le.s32.totalorder %v1213, %v1366
        %vm1457 = vcmp.le.s32.totalorder %v1213, %v1369
        %vm1458 = vcmp.le.s32.totalorder %v1213, %v1372
        %vm1459 = vcmp.le.s32.totalorder %v1213, %v1375
        %vm1460 = vcmp.le.s32.totalorder %v1213, %v1378
        %vm1461 = vcmp.le.s32.totalorder %v1213, %v1381
        %vm1462 = vcmp.le.s32.totalorder %v1213, %v1384
        %vm1463 = vcmp.le.s32.totalorder %v1213, %v1387
        %vm1464 = vcmp.le.s32.totalorder %v1213, %v1390
        %vm1465 = vcmp.le.s32.totalorder %v1213, %v1393
        %vm1466 = vcmp.le.s32.totalorder %v1213, %v1396
        %vm1467 = vcmp.le.s32.totalorder %v1213, %v1399
        %vm1468 = vcmp.le.s32.totalorder %v1213, %v1402
        %vm1469 = vcmp.le.s32.totalorder %v1213, %v1405
        %v1470 = vsub.f32 1.0, %v1020
        %v1471 = vsub.f32 1.0, %v1021
        %v1472 = vsub.f32 1.0, %v1022
        %v1473 = vsub.f32 1.0, %v1023
        %v1474 = vsub.f32 1.0, %v1024
        %v1475 = vsub.f32 1.0, %v1025
        %v1476 = vsub.f32 1.0, %v1026
        %v1477 = vsub.f32 1.0, %v1027
        %v1478 = vsub.f32 1.0, %v1028
        %v1479 = vsub.f32 1.0, %v1029
        %v1480 = vsub.f32 1.0, %v1030
        %v1481 = vsub.f32 1.0, %v1031
        %v1482 = vsub.f32 1.0, %v1032
        %v1483 = vsub.f32 1.0, %v1033
        %v1484 = vsub.f32 1.0, %v1034
        %v1485 = vsub.f32 1.0, %v1035
        %v1486 = vsub.f32 1.0, %v1036
        %v1487 = vsub.f32 1.0, %v1037
        %v1488 = vsub.f32 1.0, %v1038
        %v1489 = vsub.f32 1.0, %v1039
        %v1490 = vsub.f32 1.0, %v1040
        %v1491 = vsub.f32 1.0, %v1041
        %v1492 = vsub.f32 1.0, %v1042
        %v1493 = vsub.f32 1.0, %v1043
        %v1494 = vsub.f32 1.0, %v1044
        %v1495 = vsub.f32 1.0, %v1045
        %v1496 = vsub.f32 1.0, %v1046
        %v1497 = vsub.f32 1.0, %v1047
        %v1498 = vsub.f32 1.0, %v1048
        %v1499 = vsub.f32 1.0, %v1049
        %v1500 = vsub.f32 1.0, %v1050
        %v1501 = vsub.f32 1.0, %v1051
        %v1502 = vsub.f32 1.0, %v1052
        %v1503 = vsub.f32 1.0, %v1053
        %v1504 = vsub.f32 1.0, %v1054
        %v1505 = vsub.f32 1.0, %v1055
        %v1506 = vsub.f32 1.0, %v1056
        %v1507 = vsub.f32 1.0, %v1057
        %v1508 = vsub.f32 1.0, %v1058
        %v1509 = vsub.f32 1.0, %v1059
        %v1510 = vsub.f32 1.0, %v1060
        %v1511 = vsub.f32 1.0, %v1061
        %v1512 = vsub.f32 1.0, %v1062
        %v1513 = vsub.f32 1.0, %v1063
        %v1514 = vsub.f32 1.0, %v1064
        %v1515 = vsub.f32 1.0, %v1065
        %v1516 = vsub.f32 1.0, %v1066
        %v1517 = vsub.f32 1.0, %v1067
        %v1518 = vsub.f32 1.0, %v1068
        %v1519 = vsub.f32 1.0, %v1069
        %v1520 = vsub.f32 1.0, %v1070
        %v1521 = vsub.f32 1.0, %v1071
        %v1522 = vsub.f32 1.0, %v1072
        %v1523 = vsub.f32 1.0, %v1073
        %v1524 = vsub.f32 1.0, %v1074
        %v1525 = vsub.f32 1.0, %v1075
        %v1526 = vsub.f32 1.0, %v1076
        %v1527 = vsub.f32 1.0, %v1077
        %v1528 = vsub.f32 1.0, %v1078
        %v1529 = vsub.f32 1.0, %v1079
        %v1530 = vsub.f32 1.0, %v1080
        %v1531 = vsub.f32 1.0, %v1081
        %v1532 = vsub.f32 1.0, %v1082
        %v1533 = vsub.f32 1.0, %v1083
        %v1534 = vsel %vm1406, %v1020, %v1470
        %v1535 = vsel %vm1407, %v1021, %v1471
        %v1536 = vsel %vm1408, %v1022, %v1472
        %v1537 = vsel %vm1409, %v1023, %v1473
        %v1538 = vsel %vm1410, %v1024, %v1474
        %v1539 = vsel %vm1411, %v1025, %v1475
        %v1540 = vsel %vm1412, %v1026, %v1476
        %v1541 = vsel %vm1413, %v1027, %v1477
        %v1542 = vsel %vm1414, %v1028, %v1478
        %v1543 = vsel %vm1415, %v1029, %v1479
        %v1544 = vsel %vm1416, %v1030, %v1480
        %v1545 = vsel %vm1417, %v1031, %v1481
        %v1546 = vsel %vm1418, %v1032, %v1482
        %v1547 = vsel %vm1419, %v1033, %v1483
        %v1548 = vsel %vm1420, %v1034, %v1484
        %v1549 = vsel %vm1421, %v1035, %v1485
        %v1550 = vsel %vm1422, %v1036, %v1486
        %v1551 = vsel %vm1423, %v1037, %v1487
        %v1552 = vsel %vm1424, %v1038, %v1488
        %v1553 = vsel %vm1425, %v1039, %v1489
        %v1554 = vsel %vm1426, %v1040, %v1490
        %v1555 = vsel %vm1427, %v1041, %v1491
        %v1556 = vsel %vm1428, %v1042, %v1492
        %v1557 = vsel %vm1429, %v1043, %v1493
        %v1558 = vsel %vm1430, %v1044, %v1494
        %v1559 = vsel %vm1431, %v1045, %v1495
        %v1560 = vsel %vm1432, %v1046, %v1496
        %v1561 = vsel %vm1433, %v1047, %v1497
        %v1562 = vsel %vm1434, %v1048, %v1498
        %v1563 = vsel %vm1435, %v1049, %v1499
        %v1564 = vsel %vm1436, %v1050, %v1500
        %v1565 = vsel %vm1437, %v1051, %v1501
        %v1566 = vsel %vm1438, %v1052, %v1502
        %v1567 = vsel %vm1439, %v1053, %v1503
        %v1568 = vsel %vm1440, %v1054, %v1504
        %v1569 = vsel %vm1441, %v1055, %v1505
        %v1570 = vsel %vm1442, %v1056, %v1506
        %v1571 = vsel %vm1443, %v1057, %v1507
        %v1572 = vsel %vm1444, %v1058, %v1508
        %v1573 = vsel %vm1445, %v1059, %v1509
        %v1574 = vsel %vm1446, %v1060, %v1510
        %v1575 = vsel %vm1447, %v1061, %v1511
        %v1576 = vsel %vm1448, %v1062, %v1512
        %v1577 = vsel %vm1449, %v1063, %v1513
        %v1578 = vsel %vm1450, %v1064, %v1514
        %v1579 = vsel %vm1451, %v1065, %v1515
        %v1580 = vsel %vm1452, %v1066, %v1516
        %v1581 = vsel %vm1453, %v1067, %v1517
        %v1582 = vsel %vm1454, %v1068, %v1518
        %v1583 = vsel %vm1455, %v1069, %v1519
        %v1584 = vsel %vm1456, %v1070, %v1520
        %v1585 = vsel %vm1457, %v1071, %v1521
        %v1586 = vsel %vm1458, %v1072, %v1522
        %v1587 = vsel %vm1459, %v1073, %v1523
        %v1588 = vsel %vm1460, %v1074, %v1524
        %v1589 = vsel %vm1461, %v1075, %v1525
        %v1590 = vsel %vm1462, %v1076, %v1526
        %v1591 = vsel %vm1463, %v1077, %v1527
        %v1592 = vsel %vm1464, %v1078, %v1528
        %v1593 = vsel %vm1465, %v1079, %v1529
        %v1594 = vsel %vm1466, %v1080, %v1530
        %v1595 = vsel %vm1467, %v1081, %v1531
        %v1596 = vsel %vm1468, %v1082, %v1532
        %v1597 = vsel %vm1469, %v1083, %v1533
        %v1598 = vmax.f32 %v1534, 1e-08
        %v1599 = vmax.f32 %v1535, 1e-08
        %v1600 = vmax.f32 %v1536, 1e-08
        %v1601 = vmax.f32 %v1537, 1e-08
        %v1602 = vmax.f32 %v1538, 1e-08
        %v1603 = vmax.f32 %v1539, 1e-08
        %v1604 = vmax.f32 %v1540, 1e-08
        %v1605 = vmax.f32 %v1541, 1e-08
        %v1606 = vmax.f32 %v1542, 1e-08
        %v1607 = vmax.f32 %v1543, 1e-08
        %v1608 = vmax.f32 %v1544, 1e-08
        %v1609 = vmax.f32 %v1545, 1e-08
        %v1610 = vmax.f32 %v1546, 1e-08
        %v1611 = vmax.f32 %v1547, 1e-08
        %v1612 = vmax.f32 %v1548, 1e-08
        %v1613 = vmax.f32 %v1549, 1e-08
        %v1614 = vmax.f32 %v1550, 1e-08
        %v1615 = vmax.f32 %v1551, 1e-08
        %v1616 = vmax.f32 %v1552, 1e-08
        %v1617 = vmax.f32 %v1553, 1e-08
        %v1618 = vmax.f32 %v1554, 1e-08
        %v1619 = vmax.f32 %v1555, 1e-08
        %v1620 = vmax.f32 %v1556, 1e-08
        %v1621 = vmax.f32 %v1557, 1e-08
        %v1622 = vmax.f32 %v1558, 1e-08
        %v1623 = vmax.f32 %v1559, 1e-08
        %v1624 = vmax.f32 %v1560, 1e-08
        %v1625 = vmax.f32 %v1561, 1e-08
        %v1626 = vmax.f32 %v1562, 1e-08
        %v1627 = vmax.f32 %v1563, 1e-08
        %v1628 = vmax.f32 %v1564, 1e-08
        %v1629 = vmax.f32 %v1565, 1e-08
        %v1630 = vmax.f32 %v1566, 1e-08
        %v1631 = vmax.f32 %v1567, 1e-08
        %v1632 = vmax.f32 %v1568, 1e-08
        %v1633 = vmax.f32 %v1569, 1e-08
        %v1634 = vmax.f32 %v1570, 1e-08
        %v1635 = vmax.f32 %v1571, 1e-08
        %v1636 = vmax.f32 %v1572, 1e-08
        %v1637 = vmax.f32 %v1573, 1e-08
        %v1638 = vmax.f32 %v1574, 1e-08
        %v1639 = vmax.f32 %v1575, 1e-08
        %v1640 = vmax.f32 %v1576, 1e-08
        %v1641 = vmax.f32 %v1577, 1e-08
        %v1642 = vmax.f32 %v1578, 1e-08
        %v1643 = vmax.f32 %v1579, 1e-08
        %v1644 = vmax.f32 %v1580, 1e-08
        %v1645 = vmax.f32 %v1581, 1e-08
        %v1646 = vmax.f32 %v1582, 1e-08
        %v1647 = vmax.f32 %v1583, 1e-08
        %v1648 = vmax.f32 %v1584, 1e-08
        %v1649 = vmax.f32 %v1585, 1e-08
        %v1650 = vmax.f32 %v1586, 1e-08
        %v1651 = vmax.f32 %v1587, 1e-08
        %v1652 = vmax.f32 %v1588, 1e-08
        %v1653 = vmax.f32 %v1589, 1e-08
        %v1654 = vmax.f32 %v1590, 1e-08
        %v1655 = vmax.f32 %v1591, 1e-08
        %v1656 = vmax.f32 %v1592, 1e-08
        %v1657 = vmax.f32 %v1593, 1e-08
        %v1658 = vmax.f32 %v1594, 1e-08
        %v1659 = vmax.f32 %v1595, 1e-08
        %v1660 = vmax.f32 %v1596, 1e-08
        %v1661 = vmax.f32 %v1597, 1e-08
        %v1662 = vlog2.pop %v1598
        %v1663 = vmul.f32 %v1662, 0.6931472
        %v1664 = vlog2.pop %v1599
        %v1665 = vmul.f32 %v1664, 0.6931472
        %v1666 = vlog2.pop %v1600
        %v1667 = vmul.f32 %v1666, 0.6931472
        %v1668 = vlog2.pop %v1601
        %v1669 = vmul.f32 %v1668, 0.6931472
        %v1670 = vlog2.pop %v1602
        %v1671 = vmul.f32 %v1670, 0.6931472
        %v1672 = vlog2.pop %v1603
        %v1673 = vmul.f32 %v1672, 0.6931472
        %v1674 = vlog2.pop %v1604
        %v1675 = vmul.f32 %v1674, 0.6931472
        %v1676 = vlog2.pop %v1605
        %v1677 = vmul.f32 %v1676, 0.6931472
        %v1678 = vlog2.pop %v1606
        %v1679 = vmul.f32 %v1678, 0.6931472
        %v1680 = vlog2.pop %v1607
        %v1681 = vmul.f32 %v1680, 0.6931472
        %v1682 = vlog2.pop %v1608
        %v1683 = vmul.f32 %v1682, 0.6931472
        %v1684 = vlog2.pop %v1609
        %v1685 = vmul.f32 %v1684, 0.6931472
        %v1686 = vlog2.pop %v1610
        %v1687 = vmul.f32 %v1686, 0.6931472
        %v1688 = vlog2.pop %v1611
        %v1689 = vmul.f32 %v1688, 0.6931472
        %v1690 = vlog2.pop %v1612
        %v1691 = vmul.f32 %v1690, 0.6931472
        %v1692 = vlog2.pop %v1613
        %v1693 = vmul.f32 %v1692, 0.6931472
        %v1694 = vlog2.pop %v1614
        %v1695 = vmul.f32 %v1694, 0.6931472
        %v1696 = vlog2.pop %v1615
        %v1697 = vmul.f32 %v1696, 0.6931472
        %v1698 = vlog2.pop %v1616
        %v1699 = vmul.f32 %v1698, 0.6931472
        %v1700 = vlog2.pop %v1617
        %v1701 = vmul.f32 %v1700, 0.6931472
        %v1702 = vlog2.pop %v1618
        %v1703 = vmul.f32 %v1702, 0.6931472
        %v1704 = vlog2.pop %v1619
        %v1705 = vmul.f32 %v1704, 0.6931472
        %v1706 = vlog2.pop %v1620
        %v1707 = vmul.f32 %v1706, 0.6931472
        %v1708 = vlog2.pop %v1621
        %v1709 = vmul.f32 %v1708, 0.6931472
        %v1710 = vlog2.pop %v1622
        %v1711 = vmul.f32 %v1710, 0.6931472
        %v1712 = vlog2.pop %v1623
        %v1713 = vmul.f32 %v1712, 0.6931472
        %v1714 = vlog2.pop %v1624
        %v1715 = vmul.f32 %v1714, 0.6931472
        %v1716 = vlog2.pop %v1625
        %v1717 = vmul.f32 %v1716, 0.6931472
        %v1718 = vlog2.pop %v1626
        %v1719 = vmul.f32 %v1718, 0.6931472
        %v1720 = vlog2.pop %v1627
        %v1721 = vmul.f32 %v1720, 0.6931472
        %v1722 = vlog2.pop %v1628
        %v1723 = vmul.f32 %v1722, 0.6931472
        %v1724 = vlog2.pop %v1629
        %v1725 = vmul.f32 %v1724, 0.6931472
        %v1726 = vlog2.pop %v1630
        %v1727 = vmul.f32 %v1726, 0.6931472
        %v1728 = vlog2.pop %v1631
        %v1729 = vmul.f32 %v1728, 0.6931472
        %v1730 = vlog2.pop %v1632
        %v1731 = vmul.f32 %v1730, 0.6931472
        %v1732 = vlog2.pop %v1633
        %v1733 = vmul.f32 %v1732, 0.6931472
        %v1734 = vlog2.pop %v1634
        %v1735 = vmul.f32 %v1734, 0.6931472
        %v1736 = vlog2.pop %v1635
        %v1737 = vmul.f32 %v1736, 0.6931472
        %v1738 = vlog2.pop %v1636
        %v1739 = vmul.f32 %v1738, 0.6931472
        %v1740 = vlog2.pop %v1637
        %v1741 = vmul.f32 %v1740, 0.6931472
        %v1742 = vlog2.pop %v1638
        %v1743 = vmul.f32 %v1742, 0.6931472
        %v1744 = vlog2.pop %v1639
        %v1745 = vmul.f32 %v1744, 0.6931472
        %v1746 = vlog2.pop %v1640
        %v1747 = vmul.f32 %v1746, 0.6931472
        %v1748 = vlog2.pop %v1641
        %v1749 = vmul.f32 %v1748, 0.6931472
        %v1750 = vlog2.pop %v1642
        %v1751 = vmul.f32 %v1750, 0.6931472
        %v1752 = vlog2.pop %v1643
        %v1753 = vmul.f32 %v1752, 0.6931472
        %v1754 = vlog2.pop %v1644
        %v1755 = vmul.f32 %v1754, 0.6931472
        %v1756 = vlog2.pop %v1645
        %v1757 = vmul.f32 %v1756, 0.6931472
        %v1758 = vlog2.pop %v1646
        %v1759 = vmul.f32 %v1758, 0.6931472
        %v1760 = vlog2.pop %v1647
        %v1761 = vmul.f32 %v1760, 0.6931472
        %v1762 = vlog2.pop %v1648
        %v1763 = vmul.f32 %v1762, 0.6931472
        %v1764 = vlog2.pop %v1649
        %v1765 = vmul.f32 %v1764, 0.6931472
        %v1766 = vlog2.pop %v1650
        %v1767 = vmul.f32 %v1766, 0.6931472
        %v1768 = vlog2.pop %v1651
        %v1769 = vmul.f32 %v1768, 0.6931472
        %v1770 = vlog2.pop %v1652
        %v1771 = vmul.f32 %v1770, 0.6931472
        %v1772 = vlog2.pop %v1653
        %v1773 = vmul.f32 %v1772, 0.6931472
        %v1774 = vlog2.pop %v1654
        %v1775 = vmul.f32 %v1774, 0.6931472
        %v1776 = vlog2.pop %v1655
        %v1777 = vmul.f32 %v1776, 0.6931472
        %v1778 = vlog2.pop %v1656
        %v1779 = vmul.f32 %v1778, 0.6931472
        %v1780 = vlog2.pop %v1657
        %v1781 = vmul.f32 %v1780, 0.6931472
        %v1782 = vlog2.pop %v1658
        %v1783 = vmul.f32 %v1782, 0.6931472
        %v1784 = vlog2.pop %v1659
        %v1785 = vmul.f32 %v1784, 0.6931472
        %v1786 = vlog2.pop %v1660
        %v1787 = vmul.f32 %v1786, 0.6931472
        %v1788 = vlog2.pop %v1661
        %v1789 = vmul.f32 %v1788, 0.6931472
        %s1790 = smul.u32 %s17, 2
        %s1791 = sadd.s32 %s1790, %s18
        %s1792 = smul.u32 %s1791, 256
        %v1793 = vlaneseq
        %v1794 = vshrl.u32 %v1793, 7
        %v1795 = vadd.s32 %v1794, 8
        %v1796 = vadd.s32 %v1794, 16
        %v1797 = vadd.s32 %v1794, 24
        %v1798 = vadd.s32 %v1794, 32
        %v1799 = vadd.s32 %v1794, 40
        %v1800 = vadd.s32 %v1794, 48
        %v1801 = vadd.s32 %v1794, 56
        %v1802 = vadd.s32 %v1794, 64
        %v1803 = vadd.s32 %v1794, 72
        %v1804 = vadd.s32 %v1794, 80
        %v1805 = vadd.s32 %v1794, 88
        %v1806 = vadd.s32 %v1794, 96
        %v1807 = vadd.s32 %v1794, 104
        %v1808 = vadd.s32 %v1794, 112
        %v1809 = vadd.s32 %v1794, 120
        %v1810 = vadd.s32 %v1794, 128
        %v1811 = vadd.s32 %v1794, 136
        %v1812 = vadd.s32 %v1794, 144
        %v1813 = vadd.s32 %v1794, 152
        %v1814 = vadd.s32 %v1794, 160
        %v1815 = vadd.s32 %v1794, 168
        %v1816 = vadd.s32 %v1794, 176
        %v1817 = vadd.s32 %v1794, 184
        %v1818 = vadd.s32 %v1794, 192
        %v1819 = vadd.s32 %v1794, 200
        %v1820 = vadd.s32 %v1794, 208
        %v1821 = vadd.s32 %v1794, 216
        %v1822 = vadd.s32 %v1794, 224
        %v1823 = vadd.s32 %v1794, 232
        %v1824 = vadd.s32 %v1794, 240
        %v1825 = vadd.s32 %v1794, 248
        %v1826 = vstv %s1792
        %v1827 = vadd.s32 %v1826, %v1794
        %v1828 = vadd.s32 %v1826, %v1795
        %v1829 = vadd.s32 %v1826, %v1796
        %v1830 = vadd.s32 %v1826, %v1797
        %v1831 = vadd.s32 %v1826, %v1798
        %v1832 = vadd.s32 %v1826, %v1799
        %v1833 = vadd.s32 %v1826, %v1800
        %v1834 = vadd.s32 %v1826, %v1801
        %v1835 = vadd.s32 %v1826, %v1802
        %v1836 = vadd.s32 %v1826, %v1803
        %v1837 = vadd.s32 %v1826, %v1804
        %v1838 = vadd.s32 %v1826, %v1805
        %v1839 = vadd.s32 %v1826, %v1806
        %v1840 = vadd.s32 %v1826, %v1807
        %v1841 = vadd.s32 %v1826, %v1808
        %v1842 = vadd.s32 %v1826, %v1809
        %v1843 = vadd.s32 %v1826, %v1810
        %v1844 = vadd.s32 %v1826, %v1811
        %v1845 = vadd.s32 %v1826, %v1812
        %v1846 = vadd.s32 %v1826, %v1813
        %v1847 = vadd.s32 %v1826, %v1814
        %v1848 = vadd.s32 %v1826, %v1815
        %v1849 = vadd.s32 %v1826, %v1816
        %v1850 = vadd.s32 %v1826, %v1817
        %v1851 = vadd.s32 %v1826, %v1818
        %v1852 = vadd.s32 %v1826, %v1819
        %v1853 = vadd.s32 %v1826, %v1820
        %v1854 = vadd.s32 %v1826, %v1821
        %v1855 = vadd.s32 %v1826, %v1822
        %v1856 = vadd.s32 %v1826, %v1823
        %v1857 = vadd.s32 %v1826, %v1824
        %v1858 = vadd.s32 %v1826, %v1825
        %vm1859 = vcmp.lt.s32.totalorder %v1827, 1000
        %vm1860 = vcmp.lt.s32.totalorder %v1828, 1000
        %vm1861 = vcmp.lt.s32.totalorder %v1829, 1000
        %vm1862 = vcmp.lt.s32.totalorder %v1830, 1000
        %vm1863 = vcmp.lt.s32.totalorder %v1831, 1000
        %vm1864 = vcmp.lt.s32.totalorder %v1832, 1000
        %vm1865 = vcmp.lt.s32.totalorder %v1833, 1000
        %vm1866 = vcmp.lt.s32.totalorder %v1834, 1000
        %vm1867 = vcmp.lt.s32.totalorder %v1835, 1000
        %vm1868 = vcmp.lt.s32.totalorder %v1836, 1000
        %vm1869 = vcmp.lt.s32.totalorder %v1837, 1000
        %vm1870 = vcmp.lt.s32.totalorder %v1838, 1000
        %vm1871 = vcmp.lt.s32.totalorder %v1839, 1000
        %vm1872 = vcmp.lt.s32.totalorder %v1840, 1000
        %vm1873 = vcmp.lt.s32.totalorder %v1841, 1000
        %vm1874 = vcmp.lt.s32.totalorder %v1842, 1000
        %vm1875 = vcmp.lt.s32.totalorder %v1843, 1000
        %vm1876 = vcmp.lt.s32.totalorder %v1844, 1000
        %vm1877 = vcmp.lt.s32.totalorder %v1845, 1000
        %vm1878 = vcmp.lt.s32.totalorder %v1846, 1000
        %vm1879 = vcmp.lt.s32.totalorder %v1847, 1000
        %vm1880 = vcmp.lt.s32.totalorder %v1848, 1000
        %vm1881 = vcmp.lt.s32.totalorder %v1849, 1000
        %vm1882 = vcmp.lt.s32.totalorder %v1850, 1000
        %vm1883 = vcmp.lt.s32.totalorder %v1851, 1000
        %vm1884 = vcmp.lt.s32.totalorder %v1852, 1000
        %vm1885 = vcmp.lt.s32.totalorder %v1853, 1000
        %vm1886 = vcmp.lt.s32.totalorder %v1854, 1000
        %vm1887 = vcmp.lt.s32.totalorder %v1855, 1000
        %vm1888 = vcmp.lt.s32.totalorder %v1856, 1000
        %vm1889 = vcmp.lt.s32.totalorder %v1857, 1000
        %vm1890 = vcmp.lt.s32.totalorder %v1858, 1000
        %v1891 = vld [vmem:[%s949] sm:$0xff]
        %v1892 = vld [vmem:[%s949 + $0x8] sm:$0xff]
        %v1893 = vld [vmem:[%s949 + $0x10] sm:$0xff]
        %v1894 = vld [vmem:[%s949 + $0x18] sm:$0xff]
        %v1895 = vld [vmem:[%s949 + $0x20] sm:$0xff]
        %v1896 = vld [vmem:[%s949 + $0x28] sm:$0xff]
        %v1897 = vld [vmem:[%s949 + $0x30] sm:$0xff]
        %v1898 = vld [vmem:[%s949 + $0x38] sm:$0xff]
        %v1899 = vld [vmem:[%s949 + $0x40] sm:$0xff]
        %v1900 = vld [vmem:[%s949 + $0x48] sm:$0xff]
        %v1901 = vld [vmem:[%s949 + $0x50] sm:$0xff]
        %v1902 = vld [vmem:[%s949 + $0x58] sm:$0xff]
        %v1903 = vld [vmem:[%s949 + $0x60] sm:$0xff]
        %v1904 = vld [vmem:[%s949 + $0x68] sm:$0xff]
        %v1905 = vld [vmem:[%s949 + $0x70] sm:$0xff]
        %v1906 = vld [vmem:[%s949 + $0x78] sm:$0xff]
        %v1907 = vld [vmem:[%s949 + $0x80] sm:$0xff]
        %v1908 = vld [vmem:[%s949 + $0x88] sm:$0xff]
        %v1909 = vld [vmem:[%s949 + $0x90] sm:$0xff]
        %v1910 = vld [vmem:[%s949 + $0x98] sm:$0xff]
        %v1911 = vld [vmem:[%s949 + $0xa0] sm:$0xff]
        %v1912 = vld [vmem:[%s949 + $0xa8] sm:$0xff]
        %v1913 = vld [vmem:[%s949 + $0xb0] sm:$0xff]
        %v1914 = vld [vmem:[%s949 + $0xb8] sm:$0xff]
        %v1915 = vld [vmem:[%s949 + $0xc0] sm:$0xff]
        %v1916 = vld [vmem:[%s949 + $0xc8] sm:$0xff]
        %v1917 = vld [vmem:[%s949 + $0xd0] sm:$0xff]
        %v1918 = vld [vmem:[%s949 + $0xd8] sm:$0xff]
        %v1919 = vld [vmem:[%s949 + $0xe0] sm:$0xff]
        %v1920 = vld [vmem:[%s949 + $0xe8] sm:$0xff]
        %v1921 = vld [vmem:[%s949 + $0xf0] sm:$0xff]
        %v1922 = vld [vmem:[%s949 + $0xf8] sm:$0xff]
        %v1923 = vld [vmem:[%s949 + $0x100] sm:$0xff]
        %v1924 = vld [vmem:[%s949 + $0x108] sm:$0xff]
        %v1925 = vld [vmem:[%s949 + $0x110] sm:$0xff]
        %v1926 = vld [vmem:[%s949 + $0x118] sm:$0xff]
        %v1927 = vld [vmem:[%s949 + $0x120] sm:$0xff]
        %v1928 = vld [vmem:[%s949 + $0x128] sm:$0xff]
        %v1929 = vld [vmem:[%s949 + $0x130] sm:$0xff]
        %v1930 = vld [vmem:[%s949 + $0x138] sm:$0xff]
        %v1931 = vld [vmem:[%s949 + $0x140] sm:$0xff]
        %v1932 = vld [vmem:[%s949 + $0x148] sm:$0xff]
        %v1933 = vld [vmem:[%s949 + $0x150] sm:$0xff]
        %v1934 = vld [vmem:[%s949 + $0x158] sm:$0xff]
        %v1935 = vld [vmem:[%s949 + $0x160] sm:$0xff]
        %v1936 = vld [vmem:[%s949 + $0x168] sm:$0xff]
        %v1937 = vld [vmem:[%s949 + $0x170] sm:$0xff]
        %v1938 = vld [vmem:[%s949 + $0x178] sm:$0xff]
        %v1939 = vld [vmem:[%s949 + $0x180] sm:$0xff]
        %v1940 = vld [vmem:[%s949 + $0x188] sm:$0xff]
        %v1941 = vld [vmem:[%s949 + $0x190] sm:$0xff]
        %v1942 = vld [vmem:[%s949 + $0x198] sm:$0xff]
        %v1943 = vld [vmem:[%s949 + $0x1a0] sm:$0xff]
        %v1944 = vld [vmem:[%s949 + $0x1a8] sm:$0xff]
        %v1945 = vld [vmem:[%s949 + $0x1b0] sm:$0xff]
        %v1946 = vld [vmem:[%s949 + $0x1b8] sm:$0xff]
        %v1947 = vld [vmem:[%s949 + $0x1c0] sm:$0xff]
        %v1948 = vld [vmem:[%s949 + $0x1c8] sm:$0xff]
        %v1949 = vld [vmem:[%s949 + $0x1d0] sm:$0xff]
        %v1950 = vld [vmem:[%s949 + $0x1d8] sm:$0xff]
        %v1951 = vld [vmem:[%s949 + $0x1e0] sm:$0xff]
        %v1952 = vld [vmem:[%s949 + $0x1e8] sm:$0xff]
        %v1953 = vld [vmem:[%s949 + $0x1f0] sm:$0xff]
        %v1954 = vld [vmem:[%s949 + $0x1f8] sm:$0xff]
        %v1955 = vsel %vm1859, %v1663, 0.0
        %v1956 = vsel %vm1860, %v1665, 0.0
        %v1957 = vsel %vm1861, %v1667, 0.0
        %v1958 = vsel %vm1862, %v1669, 0.0
        %v1959 = vsel %vm1863, %v1671, 0.0
        %v1960 = vsel %vm1864, %v1673, 0.0
        %v1961 = vsel %vm1865, %v1675, 0.0
        %v1962 = vsel %vm1866, %v1677, 0.0
        %v1963 = vsel %vm1867, %v1679, 0.0
        %v1964 = vsel %vm1868, %v1681, 0.0
        %v1965 = vsel %vm1869, %v1683, 0.0
        %v1966 = vsel %vm1870, %v1685, 0.0
        %v1967 = vsel %vm1871, %v1687, 0.0
        %v1968 = vsel %vm1872, %v1689, 0.0
        %v1969 = vsel %vm1873, %v1691, 0.0
        %v1970 = vsel %vm1874, %v1693, 0.0
        %v1971 = vsel %vm1875, %v1695, 0.0
        %v1972 = vsel %vm1876, %v1697, 0.0
        %v1973 = vsel %vm1877, %v1699, 0.0
        %v1974 = vsel %vm1878, %v1701, 0.0
        %v1975 = vsel %vm1879, %v1703, 0.0
        %v1976 = vsel %vm1880, %v1705, 0.0
        %v1977 = vsel %vm1881, %v1707, 0.0
        %v1978 = vsel %vm1882, %v1709, 0.0
        %v1979 = vsel %vm1883, %v1711, 0.0
        %v1980 = vsel %vm1884, %v1713, 0.0
        %v1981 = vsel %vm1885, %v1715, 0.0
        %v1982 = vsel %vm1886, %v1717, 0.0
        %v1983 = vsel %vm1887, %v1719, 0.0
        %v1984 = vsel %vm1888, %v1721, 0.0
        %v1985 = vsel %vm1889, %v1723, 0.0
        %v1986 = vsel %vm1890, %v1725, 0.0
        %v1987 = vsel %vm1859, %v1727, 0.0
        %v1988 = vsel %vm1860, %v1729, 0.0
        %v1989 = vsel %vm1861, %v1731, 0.0
        %v1990 = vsel %vm1862, %v1733, 0.0
        %v1991 = vsel %vm1863, %v1735, 0.0
        %v1992 = vsel %vm1864, %v1737, 0.0
        %v1993 = vsel %vm1865, %v1739, 0.0
        %v1994 = vsel %vm1866, %v1741, 0.0
        %v1995 = vsel %vm1867, %v1743, 0.0
        %v1996 = vsel %vm1868, %v1745, 0.0
        %v1997 = vsel %vm1869, %v1747, 0.0
        %v1998 = vsel %vm1870, %v1749, 0.0
        %v1999 = vsel %vm1871, %v1751, 0.0
        %v2000 = vsel %vm1872, %v1753, 0.0
        %v2001 = vsel %vm1873, %v1755, 0.0
        %v2002 = vsel %vm1874, %v1757, 0.0
        %v2003 = vsel %vm1875, %v1759, 0.0
        %v2004 = vsel %vm1876, %v1761, 0.0
        %v2005 = vsel %vm1877, %v1763, 0.0
        %v2006 = vsel %vm1878, %v1765, 0.0
        %v2007 = vsel %vm1879, %v1767, 0.0
        %v2008 = vsel %vm1880, %v1769, 0.0
        %v2009 = vsel %vm1881, %v1771, 0.0
        %v2010 = vsel %vm1882, %v1773, 0.0
        %v2011 = vsel %vm1883, %v1775, 0.0
        %v2012 = vsel %vm1884, %v1777, 0.0
        %v2013 = vsel %vm1885, %v1779, 0.0
        %v2014 = vsel %vm1886, %v1781, 0.0
        %v2015 = vsel %vm1887, %v1783, 0.0
        %v2016 = vsel %vm1888, %v1785, 0.0
        %v2017 = vsel %vm1889, %v1787, 0.0
        %v2018 = vsel %vm1890, %v1789, 0.0
        %v2019 = vadd.f32 %v1891, %v1955
        %v2020 = vadd.f32 %v1892, %v1956
        %v2021 = vadd.f32 %v1893, %v1957
        %v2022 = vadd.f32 %v1894, %v1958
        %v2023 = vadd.f32 %v1895, %v1959
        %v2024 = vadd.f32 %v1896, %v1960
        %v2025 = vadd.f32 %v1897, %v1961
        %v2026 = vadd.f32 %v1898, %v1962
        %v2027 = vadd.f32 %v1899, %v1963
        %v2028 = vadd.f32 %v1900, %v1964
        %v2029 = vadd.f32 %v1901, %v1965
        %v2030 = vadd.f32 %v1902, %v1966
        %v2031 = vadd.f32 %v1903, %v1967
        %v2032 = vadd.f32 %v1904, %v1968
        %v2033 = vadd.f32 %v1905, %v1969
        %v2034 = vadd.f32 %v1906, %v1970
        %v2035 = vadd.f32 %v1907, %v1971
        %v2036 = vadd.f32 %v1908, %v1972
        %v2037 = vadd.f32 %v1909, %v1973
        %v2038 = vadd.f32 %v1910, %v1974
        %v2039 = vadd.f32 %v1911, %v1975
        %v2040 = vadd.f32 %v1912, %v1976
        %v2041 = vadd.f32 %v1913, %v1977
        %v2042 = vadd.f32 %v1914, %v1978
        %v2043 = vadd.f32 %v1915, %v1979
        %v2044 = vadd.f32 %v1916, %v1980
        %v2045 = vadd.f32 %v1917, %v1981
        %v2046 = vadd.f32 %v1918, %v1982
        %v2047 = vadd.f32 %v1919, %v1983
        %v2048 = vadd.f32 %v1920, %v1984
        %v2049 = vadd.f32 %v1921, %v1985
        %v2050 = vadd.f32 %v1922, %v1986
        %v2051 = vadd.f32 %v1923, %v1987
        %v2052 = vadd.f32 %v1924, %v1988
        %v2053 = vadd.f32 %v1925, %v1989
        %v2054 = vadd.f32 %v1926, %v1990
        %v2055 = vadd.f32 %v1927, %v1991
        %v2056 = vadd.f32 %v1928, %v1992
        %v2057 = vadd.f32 %v1929, %v1993
        %v2058 = vadd.f32 %v1930, %v1994
        %v2059 = vadd.f32 %v1931, %v1995
        %v2060 = vadd.f32 %v1932, %v1996
        %v2061 = vadd.f32 %v1933, %v1997
        %v2062 = vadd.f32 %v1934, %v1998
        %v2063 = vadd.f32 %v1935, %v1999
        %v2064 = vadd.f32 %v1936, %v2000
        %v2065 = vadd.f32 %v1937, %v2001
        %v2066 = vadd.f32 %v1938, %v2002
        %v2067 = vadd.f32 %v1939, %v2003
        %v2068 = vadd.f32 %v1940, %v2004
        %v2069 = vadd.f32 %v1941, %v2005
        %v2070 = vadd.f32 %v1942, %v2006
        %v2071 = vadd.f32 %v1943, %v2007
        %v2072 = vadd.f32 %v1944, %v2008
        %v2073 = vadd.f32 %v1945, %v2009
        %v2074 = vadd.f32 %v1946, %v2010
        %v2075 = vadd.f32 %v1947, %v2011
        %v2076 = vadd.f32 %v1948, %v2012
        %v2077 = vadd.f32 %v1949, %v2013
        %v2078 = vadd.f32 %v1950, %v2014
        %v2079 = vadd.f32 %v1951, %v2015
        %v2080 = vadd.f32 %v1952, %v2016
        %v2081 = vadd.f32 %v1953, %v2017
        %v2082 = vadd.f32 %v1954, %v2018
        %vm2083 = vcmask 64512
        %2084 = vst.msk [vmem:[%s949] sm:$0xff] %vm2083, %v2019
        %2085 = vst.msk [vmem:[%s949 + $0x8] sm:$0xff] %vm2083, %v2020
        %2086 = vst.msk [vmem:[%s949 + $0x10] sm:$0xff] %vm2083, %v2021
        %2087 = vst.msk [vmem:[%s949 + $0x18] sm:$0xff] %vm2083, %v2022
        %2088 = vst.msk [vmem:[%s949 + $0x20] sm:$0xff] %vm2083, %v2023
        %2089 = vst.msk [vmem:[%s949 + $0x28] sm:$0xff] %vm2083, %v2024
        %2090 = vst.msk [vmem:[%s949 + $0x30] sm:$0xff] %vm2083, %v2025
        %2091 = vst.msk [vmem:[%s949 + $0x38] sm:$0xff] %vm2083, %v2026
        %2092 = vst.msk [vmem:[%s949 + $0x40] sm:$0xff] %vm2083, %v2027
        %2093 = vst.msk [vmem:[%s949 + $0x48] sm:$0xff] %vm2083, %v2028
        %2094 = vst.msk [vmem:[%s949 + $0x50] sm:$0xff] %vm2083, %v2029
        %2095 = vst.msk [vmem:[%s949 + $0x58] sm:$0xff] %vm2083, %v2030
        %2096 = vst.msk [vmem:[%s949 + $0x60] sm:$0xff] %vm2083, %v2031
        %2097 = vst.msk [vmem:[%s949 + $0x68] sm:$0xff] %vm2083, %v2032
        %2098 = vst.msk [vmem:[%s949 + $0x70] sm:$0xff] %vm2083, %v2033
        %2099 = vst.msk [vmem:[%s949 + $0x78] sm:$0xff] %vm2083, %v2034
        %2100 = vst.msk [vmem:[%s949 + $0x80] sm:$0xff] %vm2083, %v2035
        %2101 = vst.msk [vmem:[%s949 + $0x88] sm:$0xff] %vm2083, %v2036
        %2102 = vst.msk [vmem:[%s949 + $0x90] sm:$0xff] %vm2083, %v2037
        %2103 = vst.msk [vmem:[%s949 + $0x98] sm:$0xff] %vm2083, %v2038
        %2104 = vst.msk [vmem:[%s949 + $0xa0] sm:$0xff] %vm2083, %v2039
        %2105 = vst.msk [vmem:[%s949 + $0xa8] sm:$0xff] %vm2083, %v2040
        %2106 = vst.msk [vmem:[%s949 + $0xb0] sm:$0xff] %vm2083, %v2041
        %2107 = vst.msk [vmem:[%s949 + $0xb8] sm:$0xff] %vm2083, %v2042
        %2108 = vst.msk [vmem:[%s949 + $0xc0] sm:$0xff] %vm2083, %v2043
        %2109 = vst.msk [vmem:[%s949 + $0xc8] sm:$0xff] %vm2083, %v2044
        %2110 = vst.msk [vmem:[%s949 + $0xd0] sm:$0xff] %vm2083, %v2045
        %2111 = vst.msk [vmem:[%s949 + $0xd8] sm:$0xff] %vm2083, %v2046
        %2112 = vst.msk [vmem:[%s949 + $0xe0] sm:$0xff] %vm2083, %v2047
        %2113 = vst.msk [vmem:[%s949 + $0xe8] sm:$0xff] %vm2083, %v2048
        %2114 = vst.msk [vmem:[%s949 + $0xf0] sm:$0xff] %vm2083, %v2049
        %2115 = vst.msk [vmem:[%s949 + $0xf8] sm:$0xff] %vm2083, %v2050
        %2116 = vst.msk [vmem:[%s949 + $0x100] sm:$0xff] %vm2083, %v2051
        %2117 = vst.msk [vmem:[%s949 + $0x108] sm:$0xff] %vm2083, %v2052
        %2118 = vst.msk [vmem:[%s949 + $0x110] sm:$0xff] %vm2083, %v2053
        %2119 = vst.msk [vmem:[%s949 + $0x118] sm:$0xff] %vm2083, %v2054
        %2120 = vst.msk [vmem:[%s949 + $0x120] sm:$0xff] %vm2083, %v2055
        %2121 = vst.msk [vmem:[%s949 + $0x128] sm:$0xff] %vm2083, %v2056
        %2122 = vst.msk [vmem:[%s949 + $0x130] sm:$0xff] %vm2083, %v2057
        %2123 = vst.msk [vmem:[%s949 + $0x138] sm:$0xff] %vm2083, %v2058
        %2124 = vst.msk [vmem:[%s949 + $0x140] sm:$0xff] %vm2083, %v2059
        %2125 = vst.msk [vmem:[%s949 + $0x148] sm:$0xff] %vm2083, %v2060
        %2126 = vst.msk [vmem:[%s949 + $0x150] sm:$0xff] %vm2083, %v2061
        %2127 = vst.msk [vmem:[%s949 + $0x158] sm:$0xff] %vm2083, %v2062
        %2128 = vst.msk [vmem:[%s949 + $0x160] sm:$0xff] %vm2083, %v2063
        %2129 = vst.msk [vmem:[%s949 + $0x168] sm:$0xff] %vm2083, %v2064
        %2130 = vst.msk [vmem:[%s949 + $0x170] sm:$0xff] %vm2083, %v2065
        %2131 = vst.msk [vmem:[%s949 + $0x178] sm:$0xff] %vm2083, %v2066
        %2132 = vst.msk [vmem:[%s949 + $0x180] sm:$0xff] %vm2083, %v2067
        %2133 = vst.msk [vmem:[%s949 + $0x188] sm:$0xff] %vm2083, %v2068
        %2134 = vst.msk [vmem:[%s949 + $0x190] sm:$0xff] %vm2083, %v2069
        %2135 = vst.msk [vmem:[%s949 + $0x198] sm:$0xff] %vm2083, %v2070
        %2136 = vst.msk [vmem:[%s949 + $0x1a0] sm:$0xff] %vm2083, %v2071
        %2137 = vst.msk [vmem:[%s949 + $0x1a8] sm:$0xff] %vm2083, %v2072
        %2138 = vst.msk [vmem:[%s949 + $0x1b0] sm:$0xff] %vm2083, %v2073
        %2139 = vst.msk [vmem:[%s949 + $0x1b8] sm:$0xff] %vm2083, %v2074
        %2140 = vst.msk [vmem:[%s949 + $0x1c0] sm:$0xff] %vm2083, %v2075
        %2141 = vst.msk [vmem:[%s949 + $0x1c8] sm:$0xff] %vm2083, %v2076
        %2142 = vst.msk [vmem:[%s949 + $0x1d0] sm:$0xff] %vm2083, %v2077
        %2143 = vst.msk [vmem:[%s949 + $0x1d8] sm:$0xff] %vm2083, %v2078
        %2144 = vst.msk [vmem:[%s949 + $0x1e0] sm:$0xff] %vm2083, %v2079
        %2145 = vst.msk [vmem:[%s949 + $0x1e8] sm:$0xff] %vm2083, %v2080
        %2146 = vst.msk [vmem:[%s949 + $0x1f0] sm:$0xff] %vm2083, %v2081
        %2147 = vst.msk [vmem:[%s949 + $0x1f8] sm:$0xff] %vm2083, %v2082
        %s2148 = smul.u32 2, %s17
        %p2149 = scmp.lt.s32.totalorder %s2148, 3
        %s2150 = scalar_select %p2149, %s2148, 3
        %s2151 = smul.addr %s2150, 32
        %s2152 = smul.addr %s2151, 8
        %s2153 = scalar_lea.vmem %s2, %s2152
        // Predicated region
        $region137: #{tpu_custom_call.1} parent=123 // pred_check
          %p2154 = pneg %p111
        $region138: #{tpu_custom_call.1} parent=123 // pred_check_branch
          %2156 = sbr.rel (%p2154) target = $region140
        $region139: #{tpu_custom_call.1} parent=123 // pred_region
          %s2157 = smul.u32 2, %s17
        $region140: #{tpu_custom_call.1} parent=123 // pred_fallthru
          _
      $region124: #{tpu_custom_call.1} parent=5 // pred_fallthru
        _
      %p2158 = scmp.le.s32.totalorder 2, %s8
      // Predicated region
      $region141: #{tpu_custom_call.1} parent=5 // pred_check
        %p2159 = pneg %p2158
      $region142: #{tpu_custom_call.1} parent=5 // pred_check_branch
        %2161 = sbr.rel (%p2159) target = $region144
      $region143: #{tpu_custom_call.1} parent=5 // pred_region
        %s2162 = ssub.s32 %s8, 2
        // Predicated region
        $region145: #{tpu_custom_call.1} parent=143 // pred_check
          %p2163 = pneg %p117
        $region146: #{tpu_custom_call.1} parent=143 // pred_check_branch
          %2165 = sbr.rel (%p2163) target = $region148
        $region147: #{tpu_custom_call.1} parent=143 // pred_region
          %s2166 = smul.u32 2, %s19
          %p2167 = scmp.lt.s32.totalorder %s2166, 3
          %s2168 = scalar_select %p2167, %s2166, 3
          %s2169 = smul.addr %s2168, 32
          %s2170 = smul.addr %s2169, 8
          %s2171 = scalar_lea.vmem %s2, %s2170
        $region148: #{tpu_custom_call.1} parent=143 // pred_fallthru
          _
      $region144: #{tpu_custom_call.1} parent=5 // pred_fallthru
        _
    $region6: #{tpu_custom_call.1} parent=1 // loop_footer
      %s12 = sadd.s32 1, %s8
    $region7: #{tpu_custom_call.1} parent=1 // loop_footer_branch
      %7 = sbr.rel target = $region3
    $region8: #{tpu_custom_call.1} parent=1 // loop_exit
      _

</llo_original>
